<compile_context>
chip_gen: v7x
topology: tpu7x:2x2x1
jax: 0.10.0
libtpu: 0.0.40
codegen_flags: <defaults>
</compile_context>

<pallas_src>
import functools

import jax
import jax.numpy as jnp
from jax.experimental import pallas as pl
from jax.experimental.pallas import tpu as pltpu

# Module hyperparameters (forward is a plain MLP with tanh activations).
INPUT_DIM = 2
LATENT_DIM = 0
NUM_HIDDEN = 5
HIDDEN_DIM = 32   # small hidden size for the example run (module default is 256)
# TODO(synk): LipschitzLayer weight-normalization path (is_lipschitz=True) is a
# training-time reparameterization; default DeepSDF(is_lipschitz=False) uses plain
# nn.Linear layers, which is what is implemented here.


def deepsdf_kernel(x_ref, w_in_ref, b_in_ref, w_hid_ref, b_hid_ref,
                   w_out_ref, b_out_ref, out_ref, *, chunk):
    """Fused MLP forward in transposed layout: h[H, chunk] = tanh(W @ h + b).

    x_ref:     [d_in, block_m] bf16 (batch on lanes)
    w_*_ref:   bf16 weights in nn.Linear [out, in] convention
    b_*_ref:   f32 biases pre-broadcast to [*, chunk] lanes
    out_ref:   [1, block_m] f32
    """
    block_m = x_ref.shape[1]
    n_chunks = block_m // chunk
    num_hidden = w_hid_ref.shape[0]

    # Static, fully-unrolled chunk loop: chunk starts are compile-time constants,
    # so every slice is an aligned, zero-cost ref view.
    for c in range(n_chunks):
        sl = pl.ds(c * chunk, chunk)

        # Input layer: bf16 MXU matmul, f32 accumulate, plain VPU bias add, f32 tanh.
        h = jnp.tanh(
            jnp.dot(w_in_ref[...], x_ref[:, sl],
                    preferred_element_type=jnp.float32)
            + b_in_ref[...]
        )

        # Hidden layers (static unroll over the stacked [L, H, H] weight slab).
        for l in range(num_hidden):
            h = jnp.tanh(
                jnp.dot(w_hid_ref[l], h.astype(jnp.bfloat16),
                        preferred_element_type=jnp.float32)
                + b_hid_ref[l]
            )

        # Output layer (no activation): [1, H] @ [H, chunk] -> lane-dense [1, chunk].
        out_ref[:, sl] = (
            jnp.dot(w_out_ref[...], h.astype(jnp.bfloat16),
                    preferred_element_type=jnp.float32)
            + b_out_ref[...]
        ).astype(out_ref.dtype)


def deepsdf_forward(x, params, *, block_m=1024, chunk=512):
    """Run the fused DeepSDF MLP on x: [N, input_dim+latent_dim] -> [N, 1] (f32)."""
    w_in, b_in, w_hid, b_hid, w_out, b_out = params
    N, d_in = x.shape
    assert chunk % 128 == 0, "chunk must be a multiple of the 128-lane width"
    assert block_m % chunk == 0, "grid block must be a whole number of chunks"

    num_blocks = pl.cdiv(N, block_m)
    n_pad = num_blocks * block_m

    hd = w_in.shape[0]
    nh = w_hid.shape[0]

    # Transposed, lane-dense, bf16 MXU input layout: batch on lanes; pad ragged tail.
    xt = x.T.astype(jnp.bfloat16)                       # [d_in, N]
    if n_pad != N:
        xt = jnp.pad(xt, ((0, 0), (0, n_pad - N)))

    # bf16 weights for the MXU; biases pre-broadcast to chunk lane width (f32) so
    # every in-kernel bias add is a plain VPU add.
    w_in_b = w_in.astype(jnp.bfloat16)                  # [H, d_in]
    w_hid_b = w_hid.astype(jnp.bfloat16)                # [L, H, H]
    w_out_b = w_out.astype(jnp.bfloat16)                # [1, H]
    b_in_b = jnp.broadcast_to(b_in, (hd, chunk)).astype(jnp.float32)
    b_hid_b = jnp.broadcast_to(b_hid, (nh, hd, chunk)).astype(jnp.float32)
    b_out_b = jnp.broadcast_to(b_out, (1, chunk)).astype(jnp.float32)

    flops = 2 * n_pad * (d_in * hd + nh * hd * hd + hd)
    transcendentals = n_pad * hd * (nh + 1)
    bytes_accessed = (
        xt.size * 2 + n_pad * 4
        + (w_in_b.size + w_hid_b.size + w_out_b.size) * 2
        + (b_in_b.size + b_hid_b.size + b_out_b.size) * 4
    )

    out = pl.pallas_call(
        functools.partial(deepsdf_kernel, chunk=chunk),
        out_shape=jax.ShapeDtypeStruct((1, n_pad), jnp.float32),
        grid_spec=pltpu.PrefetchScalarGridSpec(
            num_scalar_prefetch=0,
            grid=(num_blocks,),
            in_specs=[
                pl.BlockSpec((d_in, block_m), lambda i: (0, i)),     # x (transposed)
                pl.BlockSpec((hd, d_in), lambda i: (0, 0)),          # w_in  [H, d_in]
                pl.BlockSpec((hd, chunk), lambda i: (0, 0)),         # b_in  [H, C]
                pl.BlockSpec((nh, hd, hd), lambda i: (0, 0, 0)),     # w_hid [L, H, H]
                pl.BlockSpec((nh, hd, chunk), lambda i: (0, 0, 0)),  # b_hid [L, H, C]
                pl.BlockSpec((1, hd), lambda i: (0, 0)),             # w_out [1, H]
                pl.BlockSpec((1, chunk), lambda i: (0, 0)),          # b_out [1, C]
            ],
            out_specs=pl.BlockSpec((1, block_m), lambda i: (0, i)),  # lane-dense out
        ),
        compiler_params=pltpu.CompilerParams(
            dimension_semantics=("parallel",),
        ),
        cost_estimate=pl.CostEstimate(
            flops=flops,
            transcendentals=transcendentals,
            bytes_accessed=bytes_accessed,
        ),
    )(xt, w_in_b, b_in_b, w_hid_b, b_hid_b, w_out_b, b_out_b)

    # Back to the module's [N, 1] output convention (wrapper-side plumbing only).
    return out[0, :N][:, None]


def init_deepsdf_params(key, input_dim, latent_dim, num_hidden, hidden_dim):
    """nn.Linear default init (uniform +/- 1/sqrt(fan_in)), packed for the kernel."""
    d_in = input_dim + latent_dim

    def linear(k, fan_in, fan_out):
        kw, kb = jax.random.split(k)
        bound = 1.0 / jnp.sqrt(jnp.float32(fan_in))
        w = jax.random.uniform(kw, (fan_out, fan_in), jnp.float32, -bound, bound)
        b = jax.random.uniform(kb, (fan_out, 1), jnp.float32, -bound, bound)
        return w, b

    keys = jax.random.split(key, num_hidden + 2)
    w_in, b_in = linear(keys[0], d_in, hidden_dim)
    hw, hb = [], []
    for l in range(num_hidden):
        w, b = linear(keys[1 + l], hidden_dim, hidden_dim)
        hw.append(w)
        hb.append(b)
    w_hid = jnp.stack(hw)                            # [L, H, H]
    b_hid = jnp.stack(hb)                            # [L, H, 1]
    w_out, b_out = linear(keys[-1], hidden_dim, 1)   # [1, H], [1, 1]
    return (w_in, b_in, w_hid, b_hid, w_out, b_out)


def deepsdf_reference(x, params):
    """Pure-JAX f32 reference of the same forward pass for verification."""
    w_in, b_in, w_hid, b_hid, w_out, b_out = params
    h = jnp.tanh(x @ w_in.T + b_in[:, 0])
    for l in range(w_hid.shape[0]):
        h = jnp.tanh(h @ w_hid[l].T + b_hid[l, :, 0])
    return h @ w_out.T + b_out[:, 0]


if __name__ == "__main__":
    key = jax.random.PRNGKey(0)
    kx, kp = jax.random.split(key)

    N = 4096                      # 4 grid steps of block_m=1024 (keeps v7x's 2 TCs fed)
    d_in = INPUT_DIM + LATENT_DIM
    x = jax.random.normal(kx, (N, d_in), jnp.float32)

    params = init_deepsdf_params(kp, INPUT_DIM, LATENT_DIM, NUM_HIDDEN, HIDDEN_DIM)

    out = deepsdf_forward(x, params, block_m=1024, chunk=512)
    out = jax.block_until_ready(out)

    ref = deepsdf_reference(x, params)
    assert out.shape == (N, 1)
    # Tolerance loosened vs the f32 reference because matmul inputs run in bf16 on
    # the MXU (f32 accumulation; bias-add and tanh remain f32).
    assert jnp.allclose(out, ref, atol=5e-2, rtol=5e-2), "mismatch vs reference"

    print("KERNEL_OK")
</pallas_src>

<mosaic_0001>
module attributes {stable_mosaic.version = 11 : i64} {
  func.func @deepsdf_kernel(%arg0: i32, %arg1: memref<2x1024xbf16, #tpu.memory_space<vmem>>, %arg2: memref<32x2xbf16, #tpu.memory_space<vmem>>, %arg3: memref<32x512xf32, #tpu.memory_space<vmem>>, %arg4: memref<5x32x32xbf16, #tpu.memory_space<vmem>>, %arg5: memref<5x32x512xf32, #tpu.memory_space<vmem>>, %arg6: memref<1x32xbf16, #tpu.memory_space<vmem>>, %arg7: memref<1x512xf32, #tpu.memory_space<vmem>>, %arg8: memref<1x1024xf32, #tpu.memory_space<vmem>>) attributes {dimension_semantics = [#tpu.dimension_semantics<parallel>], iteration_bounds = array<i64: 4>, scalar_prefetch = 0 : i64, scratch_operands = 0 : i64, tpu.core_type = #tpu.core_type<tc>, window_params = [{transform_indices = @transform_0, window_bounds = array<i64: 2, 1024>}, {pipeline_mode = #tpu.pipeline_mode<synchronous>, transform_indices = @transform_1, window_bounds = array<i64: 32, 2>}, {pipeline_mode = #tpu.pipeline_mode<synchronous>, transform_indices = @transform_2, window_bounds = array<i64: 32, 512>}, {pipeline_mode = #tpu.pipeline_mode<synchronous>, transform_indices = @transform_3, window_bounds = array<i64: 5, 32, 32>}, {pipeline_mode = #tpu.pipeline_mode<synchronous>, transform_indices = @transform_4, window_bounds = array<i64: 5, 32, 512>}, {pipeline_mode = #tpu.pipeline_mode<synchronous>, transform_indices = @transform_5, window_bounds = array<i64: 1, 32>}, {pipeline_mode = #tpu.pipeline_mode<synchronous>, transform_indices = @transform_6, window_bounds = array<i64: 1, 512>}, {transform_indices = @transform_7, window_bounds = array<i64: 1, 1024>}]} {
    %c0 = arith.constant 0 : index
    %c0_0 = arith.constant 0 : index
    %0 = vector.load %arg2[%c0, %c0_0] : memref<32x2xbf16, #tpu.memory_space<vmem>>, vector<32x2xbf16>
    %c0_1 = arith.constant 0 : index
    %c0_2 = arith.constant 0 : index
    %1 = vector.load %arg1[%c0_1, %c0_2] : memref<2x1024xbf16, #tpu.memory_space<vmem>>, vector<2x512xbf16>
    %cst = arith.constant dense<0.000000e+00> : vector<32x512xf32>
    %2 = tpu.matmul %0, %1, %cst {dimension_numbers = #tpu.dot_dimension_numbers<[1], [0], [0], [1], [0, 0, 1, 1], [], []>} : vector<32x2xbf16>, vector<2x512xbf16>, vector<32x512xf32> -> vector<32x512xf32>
    %c0_3 = arith.constant 0 : index
    %c0_4 = arith.constant 0 : index
    %3 = vector.load %arg3[%c0_3, %c0_4] : memref<32x512xf32, #tpu.memory_space<vmem>>, vector<32x512xf32>
    %4 = arith.addf %2, %3 : vector<32x512xf32>
    %5 = math.tanh %4 : vector<32x512xf32>
    %c0_5 = arith.constant 0 : index
    %c0_6 = arith.constant 0 : index
    %c0_7 = arith.constant 0 : index
    %6 = vector.load %arg4[%c0_5, %c0_6, %c0_7] : memref<5x32x32xbf16, #tpu.memory_space<vmem>>, vector<1x32x32xbf16>
    %7 = vector.shape_cast %6 : vector<1x32x32xbf16> to vector<32x32xbf16>
    %8 = arith.truncf %5 : vector<32x512xf32> to vector<32x512xbf16>
    %cst_8 = arith.constant dense<0.000000e+00> : vector<32x512xf32>
    %9 = tpu.matmul %7, %8, %cst_8 {dimension_numbers = #tpu.dot_dimension_numbers<[1], [0], [0], [1], [0, 0, 1, 1], [], []>} : vector<32x32xbf16>, vector<32x512xbf16>, vector<32x512xf32> -> vector<32x512xf32>
    %c0_9 = arith.constant 0 : index
    %c0_10 = arith.constant 0 : index
    %c0_11 = arith.constant 0 : index
    %10 = vector.load %arg5[%c0_9, %c0_10, %c0_11] : memref<5x32x512xf32, #tpu.memory_space<vmem>>, vector<1x32x512xf32>
    %11 = vector.shape_cast %10 : vector<1x32x512xf32> to vector<32x512xf32>
    %12 = arith.addf %9, %11 : vector<32x512xf32>
    %13 = math.tanh %12 : vector<32x512xf32>
    %c1 = arith.constant 1 : index
    %c0_12 = arith.constant 0 : index
    %c0_13 = arith.constant 0 : index
    %14 = vector.load %arg4[%c1, %c0_12, %c0_13] : memref<5x32x32xbf16, #tpu.memory_space<vmem>>, vector<1x32x32xbf16>
    %15 = vector.shape_cast %14 : vector<1x32x32xbf16> to vector<32x32xbf16>
    %16 = arith.truncf %13 : vector<32x512xf32> to vector<32x512xbf16>
    %cst_14 = arith.constant dense<0.000000e+00> : vector<32x512xf32>
    %17 = tpu.matmul %15, %16, %cst_14 {dimension_numbers = #tpu.dot_dimension_numbers<[1], [0], [0], [1], [0, 0, 1, 1], [], []>} : vector<32x32xbf16>, vector<32x512xbf16>, vector<32x512xf32> -> vector<32x512xf32>
    %c1_15 = arith.constant 1 : index
    %c0_16 = arith.constant 0 : index
    %c0_17 = arith.constant 0 : index
    %18 = vector.load %arg5[%c1_15, %c0_16, %c0_17] : memref<5x32x512xf32, #tpu.memory_space<vmem>>, vector<1x32x512xf32>
    %19 = vector.shape_cast %18 : vector<1x32x512xf32> to vector<32x512xf32>
    %20 = arith.addf %17, %19 : vector<32x512xf32>
    %21 = math.tanh %20 : vector<32x512xf32>
    %c2 = arith.constant 2 : index
    %c0_18 = arith.constant 0 : index
    %c0_19 = arith.constant 0 : index
    %22 = vector.load %arg4[%c2, %c0_18, %c0_19] : memref<5x32x32xbf16, #tpu.memory_space<vmem>>, vector<1x32x32xbf16>
    %23 = vector.shape_cast %22 : vector<1x32x32xbf16> to vector<32x32xbf16>
    %24 = arith.truncf %21 : vector<32x512xf32> to vector<32x512xbf16>
    %cst_20 = arith.constant dense<0.000000e+00> : vector<32x512xf32>
    %25 = tpu.matmul %23, %24, %cst_20 {dimension_numbers = #tpu.dot_dimension_numbers<[1], [0], [0], [1], [0, 0, 1, 1], [], []>} : vector<32x32xbf16>, vector<32x512xbf16>, vector<32x512xf32> -> vector<32x512xf32>
    %c2_21 = arith.constant 2 : index
    %c0_22 = arith.constant 0 : index
    %c0_23 = arith.constant 0 : index
    %26 = vector.load %arg5[%c2_21, %c0_22, %c0_23] : memref<5x32x512xf32, #tpu.memory_space<vmem>>, vector<1x32x512xf32>
    %27 = vector.shape_cast %26 : vector<1x32x512xf32> to vector<32x512xf32>
    %28 = arith.addf %25, %27 : vector<32x512xf32>
    %29 = math.tanh %28 : vector<32x512xf32>
    %c3 = arith.constant 3 : index
    %c0_24 = arith.constant 0 : index
    %c0_25 = arith.constant 0 : index
    %30 = vector.load %arg4[%c3, %c0_24, %c0_25] : memref<5x32x32xbf16, #tpu.memory_space<vmem>>, vector<1x32x32xbf16>
    %31 = vector.shape_cast %30 : vector<1x32x32xbf16> to vector<32x32xbf16>
    %32 = arith.truncf %29 : vector<32x512xf32> to vector<32x512xbf16>
    %cst_26 = arith.constant dense<0.000000e+00> : vector<32x512xf32>
    %33 = tpu.matmul %31, %32, %cst_26 {dimension_numbers = #tpu.dot_dimension_numbers<[1], [0], [0], [1], [0, 0, 1, 1], [], []>} : vector<32x32xbf16>, vector<32x512xbf16>, vector<32x512xf32> -> vector<32x512xf32>
    %c3_27 = arith.constant 3 : index
    %c0_28 = arith.constant 0 : index
    %c0_29 = arith.constant 0 : index
    %34 = vector.load %arg5[%c3_27, %c0_28, %c0_29] : memref<5x32x512xf32, #tpu.memory_space<vmem>>, vector<1x32x512xf32>
    %35 = vector.shape_cast %34 : vector<1x32x512xf32> to vector<32x512xf32>
    %36 = arith.addf %33, %35 : vector<32x512xf32>
    %37 = math.tanh %36 : vector<32x512xf32>
    %c4 = arith.constant 4 : index
    %c0_30 = arith.constant 0 : index
    %c0_31 = arith.constant 0 : index
    %38 = vector.load %arg4[%c4, %c0_30, %c0_31] : memref<5x32x32xbf16, #tpu.memory_space<vmem>>, vector<1x32x32xbf16>
    %39 = vector.shape_cast %38 : vector<1x32x32xbf16> to vector<32x32xbf16>
    %40 = arith.truncf %37 : vector<32x512xf32> to vector<32x512xbf16>
    %cst_32 = arith.constant dense<0.000000e+00> : vector<32x512xf32>
    %41 = tpu.matmul %39, %40, %cst_32 {dimension_numbers = #tpu.dot_dimension_numbers<[1], [0], [0], [1], [0, 0, 1, 1], [], []>} : vector<32x32xbf16>, vector<32x512xbf16>, vector<32x512xf32> -> vector<32x512xf32>
    %c4_33 = arith.constant 4 : index
    %c0_34 = arith.constant 0 : index
    %c0_35 = arith.constant 0 : index
    %42 = vector.load %arg5[%c4_33, %c0_34, %c0_35] : memref<5x32x512xf32, #tpu.memory_space<vmem>>, vector<1x32x512xf32>
    %43 = vector.shape_cast %42 : vector<1x32x512xf32> to vector<32x512xf32>
    %44 = arith.addf %41, %43 : vector<32x512xf32>
    %45 = math.tanh %44 : vector<32x512xf32>
    %c0_36 = arith.constant 0 : index
    %c0_37 = arith.constant 0 : index
    %46 = vector.load %arg6[%c0_36, %c0_37] : memref<1x32xbf16, #tpu.memory_space<vmem>>, vector<1x32xbf16>
    %47 = arith.truncf %45 : vector<32x512xf32> to vector<32x512xbf16>
    %cst_38 = arith.constant dense<0.000000e+00> : vector<1x512xf32>
    %48 = tpu.matmul %46, %47, %cst_38 {dimension_numbers = #tpu.dot_dimension_numbers<[1], [0], [0], [1], [0, 0, 1, 1], [], []>} : vector<1x32xbf16>, vector<32x512xbf16>, vector<1x512xf32> -> vector<1x512xf32>
    %c0_39 = arith.constant 0 : index
    %c0_40 = arith.constant 0 : index
    %49 = vector.load %arg7[%c0_39, %c0_40] : memref<1x512xf32, #tpu.memory_space<vmem>>, vector<1x512xf32>
    %50 = arith.addf %48, %49 : vector<1x512xf32>
    %c0_41 = arith.constant 0 : index
    %c0_42 = arith.constant 0 : index
    %51 = vector.load %arg8[%c0_41, %c0_42] : memref<1x1024xf32, #tpu.memory_space<vmem>>, vector<1x512xf32>
    tpu.vector_store %arg8[%c0_41, %c0_42], %50 {strides = array<i32>} : memref<1x1024xf32, #tpu.memory_space<vmem>>, vector<1x512xf32>,
    %c0_43 = arith.constant 0 : index
    %c0_44 = arith.constant 0 : index
    %52 = vector.load %arg2[%c0_43, %c0_44] : memref<32x2xbf16, #tpu.memory_space<vmem>>, vector<32x2xbf16>
    %c0_45 = arith.constant 0 : index
    %c512 = arith.constant 512 : index
    %53 = vector.load %arg1[%c0_45, %c512] : memref<2x1024xbf16, #tpu.memory_space<vmem>>, vector<2x512xbf16>
    %cst_46 = arith.constant dense<0.000000e+00> : vector<32x512xf32>
    %54 = tpu.matmul %52, %53, %cst_46 {dimension_numbers = #tpu.dot_dimension_numbers<[1], [0], [0], [1], [0, 0, 1, 1], [], []>} : vector<32x2xbf16>, vector<2x512xbf16>, vector<32x512xf32> -> vector<32x512xf32>
    %c0_47 = arith.constant 0 : index
    %c0_48 = arith.constant 0 : index
    %55 = vector.load %arg3[%c0_47, %c0_48] : memref<32x512xf32, #tpu.memory_space<vmem>>, vector<32x512xf32>
    %56 = arith.addf %54, %55 : vector<32x512xf32>
    %57 = math.tanh %56 : vector<32x512xf32>
    %c0_49 = arith.constant 0 : index
    %c0_50 = arith.constant 0 : index
    %c0_51 = arith.constant 0 : index
    %58 = vector.load %arg4[%c0_49, %c0_50, %c0_51] : memref<5x32x32xbf16, #tpu.memory_space<vmem>>, vector<1x32x32xbf16>
    %59 = vector.shape_cast %58 : vector<1x32x32xbf16> to vector<32x32xbf16>
    %60 = arith.truncf %57 : vector<32x512xf32> to vector<32x512xbf16>
    %cst_52 = arith.constant dense<0.000000e+00> : vector<32x512xf32>
    %61 = tpu.matmul %59, %60, %cst_52 {dimension_numbers = #tpu.dot_dimension_numbers<[1], [0], [0], [1], [0, 0, 1, 1], [], []>} : vector<32x32xbf16>, vector<32x512xbf16>, vector<32x512xf32> -> vector<32x512xf32>
    %c0_53 = arith.constant 0 : index
    %c0_54 = arith.constant 0 : index
    %c0_55 = arith.constant 0 : index
    %62 = vector.load %arg5[%c0_53, %c0_54, %c0_55] : memref<5x32x512xf32, #tpu.memory_space<vmem>>, vector<1x32x512xf32>
    %63 = vector.shape_cast %62 : vector<1x32x512xf32> to vector<32x512xf32>
    %64 = arith.addf %61, %63 : vector<32x512xf32>
    %65 = math.tanh %64 : vector<32x512xf32>
    %c1_56 = arith.constant 1 : index
    %c0_57 = arith.constant 0 : index
    %c0_58 = arith.constant 0 : index
    %66 = vector.load %arg4[%c1_56, %c0_57, %c0_58] : memref<5x32x32xbf16, #tpu.memory_space<vmem>>, vector<1x32x32xbf16>
    %67 = vector.shape_cast %66 : vector<1x32x32xbf16> to vector<32x32xbf16>
    %68 = arith.truncf %65 : vector<32x512xf32> to vector<32x512xbf16>
    %cst_59 = arith.constant dense<0.000000e+00> : vector<32x512xf32>
    %69 = tpu.matmul %67, %68, %cst_59 {dimension_numbers = #tpu.dot_dimension_numbers<[1], [0], [0], [1], [0, 0, 1, 1], [], []>} : vector<32x32xbf16>, vector<32x512xbf16>, vector<32x512xf32> -> vector<32x512xf32>
    %c1_60 = arith.constant 1 : index
    %c0_61 = arith.constant 0 : index
    %c0_62 = arith.constant 0 : index
    %70 = vector.load %arg5[%c1_60, %c0_61, %c0_62] : memref<5x32x512xf32, #tpu.memory_space<vmem>>, vector<1x32x512xf32>
    %71 = vector.shape_cast %70 : vector<1x32x512xf32> to vector<32x512xf32>
    %72 = arith.addf %69, %71 : vector<32x512xf32>
    %73 = math.tanh %72 : vector<32x512xf32>
    %c2_63 = arith.constant 2 : index
    %c0_64 = arith.constant 0 : index
    %c0_65 = arith.constant 0 : index
    %74 = vector.load %arg4[%c2_63, %c0_64, %c0_65] : memref<5x32x32xbf16, #tpu.memory_space<vmem>>, vector<1x32x32xbf16>
    %75 = vector.shape_cast %74 : vector<1x32x32xbf16> to vector<32x32xbf16>
    %76 = arith.truncf %73 : vector<32x512xf32> to vector<32x512xbf16>
    %cst_66 = arith.constant dense<0.000000e+00> : vector<32x512xf32>
    %77 = tpu.matmul %75, %76, %cst_66 {dimension_numbers = #tpu.dot_dimension_numbers<[1], [0], [0], [1], [0, 0, 1, 1], [], []>} : vector<32x32xbf16>, vector<32x512xbf16>, vector<32x512xf32> -> vector<32x512xf32>
    %c2_67 = arith.constant 2 : index
    %c0_68 = arith.constant 0 : index
    %c0_69 = arith.constant 0 : index
    %78 = vector.load %arg5[%c2_67, %c0_68, %c0_69] : memref<5x32x512xf32, #tpu.memory_space<vmem>>, vector<1x32x512xf32>
    %79 = vector.shape_cast %78 : vector<1x32x512xf32> to vector<32x512xf32>
    %80 = arith.addf %77, %79 : vector<32x512xf32>
    %81 = math.tanh %80 : vector<32x512xf32>
    %c3_70 = arith.constant 3 : index
    %c0_71 = arith.constant 0 : index
    %c0_72 = arith.constant 0 : index
    %82 = vector.load %arg4[%c3_70, %c0_71, %c0_72] : memref<5x32x32xbf16, #tpu.memory_space<vmem>>, vector<1x32x32xbf16>
    %83 = vector.shape_cast %82 : vector<1x32x32xbf16> to vector<32x32xbf16>
    %84 = arith.truncf %81 : vector<32x512xf32> to vector<32x512xbf16>
    %cst_73 = arith.constant dense<0.000000e+00> : vector<32x512xf32>
    %85 = tpu.matmul %83, %84, %cst_73 {dimension_numbers = #tpu.dot_dimension_numbers<[1], [0], [0], [1], [0, 0, 1, 1], [], []>} : vector<32x32xbf16>, vector<32x512xbf16>, vector<32x512xf32> -> vector<32x512xf32>
    %c3_74 = arith.constant 3 : index
    %c0_75 = arith.constant 0 : index
    %c0_76 = arith.constant 0 : index
    %86 = vector.load %arg5[%c3_74, %c0_75, %c0_76] : memref<5x32x512xf32, #tpu.memory_space<vmem>>, vector<1x32x512xf32>
    %87 = vector.shape_cast %86 : vector<1x32x512xf32> to vector<32x512xf32>
    %88 = arith.addf %85, %87 : vector<32x512xf32>
    %89 = math.tanh %88 : vector<32x512xf32>
    %c4_77 = arith.constant 4 : index
    %c0_78 = arith.constant 0 : index
    %c0_79 = arith.constant 0 : index
    %90 = vector.load %arg4[%c4_77, %c0_78, %c0_79] : memref<5x32x32xbf16, #tpu.memory_space<vmem>>, vector<1x32x32xbf16>
    %91 = vector.shape_cast %90 : vector<1x32x32xbf16> to vector<32x32xbf16>
    %92 = arith.truncf %89 : vector<32x512xf32> to vector<32x512xbf16>
    %cst_80 = arith.constant dense<0.000000e+00> : vector<32x512xf32>
    %93 = tpu.matmul %91, %92, %cst_80 {dimension_numbers = #tpu.dot_dimension_numbers<[1], [0], [0], [1], [0, 0, 1, 1], [], []>} : vector<32x32xbf16>, vector<32x512xbf16>, vector<32x512xf32> -> vector<32x512xf32>
    %c4_81 = arith.constant 4 : index
    %c0_82 = arith.constant 0 : index
    %c0_83 = arith.constant 0 : index
    %94 = vector.load %arg5[%c4_81, %c0_82, %c0_83] : memref<5x32x512xf32, #tpu.memory_space<vmem>>, vector<1x32x512xf32>
    %95 = vector.shape_cast %94 : vector<1x32x512xf32> to vector<32x512xf32>
    %96 = arith.addf %93, %95 : vector<32x512xf32>
    %97 = math.tanh %96 : vector<32x512xf32>
    %c0_84 = arith.constant 0 : index
    %c0_85 = arith.constant 0 : index
    %98 = vector.load %arg6[%c0_84, %c0_85] : memref<1x32xbf16, #tpu.memory_space<vmem>>, vector<1x32xbf16>
    %99 = arith.truncf %97 : vector<32x512xf32> to vector<32x512xbf16>
    %cst_86 = arith.constant dense<0.000000e+00> : vector<1x512xf32>
    %100 = tpu.matmul %98, %99, %cst_86 {dimension_numbers = #tpu.dot_dimension_numbers<[1], [0], [0], [1], [0, 0, 1, 1], [], []>} : vector<1x32xbf16>, vector<32x512xbf16>, vector<1x512xf32> -> vector<1x512xf32>
    %c0_87 = arith.constant 0 : index
    %c0_88 = arith.constant 0 : index
    %101 = vector.load %arg7[%c0_87, %c0_88] : memref<1x512xf32, #tpu.memory_space<vmem>>, vector<1x512xf32>
    %102 = arith.addf %100, %101 : vector<1x512xf32>
    %c0_89 = arith.constant 0 : index
    %c512_90 = arith.constant 512 : index
    %103 = vector.load %arg8[%c0_89, %c512_90] : memref<1x1024xf32, #tpu.memory_space<vmem>>, vector<1x512xf32>
    tpu.vector_store %arg8[%c0_89, %c512_90], %102 {strides = array<i32>} : memref<1x1024xf32, #tpu.memory_space<vmem>>, vector<1x512xf32>,
    return
  }
  func.func @transform_0(%arg0: i32) -> (i32, i32) {
    %c0_i32 = arith.constant 0 : i32
    %c0_i32_0 = arith.constant 0 : i32
    return %c0_i32, %arg0 : i32, i32
  }
  func.func @transform_1(%arg0: i32) -> (i32, i32) {
    %c0_i32 = arith.constant 0 : i32
    %c0_i32_0 = arith.constant 0 : i32
    %c0_i32_1 = arith.constant 0 : i32
    return %c0_i32, %c0_i32_0 : i32, i32
  }
  func.func @transform_2(%arg0: i32) -> (i32, i32) {
    %c0_i32 = arith.constant 0 : i32
    %c0_i32_0 = arith.constant 0 : i32
    %c0_i32_1 = arith.constant 0 : i32
    return %c0_i32, %c0_i32_0 : i32, i32
  }
  func.func @transform_3(%arg0: i32) -> (i32, i32, i32) {
    %c0_i32 = arith.constant 0 : i32
    %c0_i32_0 = arith.constant 0 : i32
    %c0_i32_1 = arith.constant 0 : i32
    %c0_i32_2 = arith.constant 0 : i32
    return %c0_i32, %c0_i32_0, %c0_i32_1 : i32, i32, i32
  }
  func.func @transform_4(%arg0: i32) -> (i32, i32, i32) {
    %c0_i32 = arith.constant 0 : i32
    %c0_i32_0 = arith.constant 0 : i32
    %c0_i32_1 = arith.constant 0 : i32
    %c0_i32_2 = arith.constant 0 : i32
    return %c0_i32, %c0_i32_0, %c0_i32_1 : i32, i32, i32
  }
  func.func @transform_5(%arg0: i32) -> (i32, i32) {
    %c0_i32 = arith.constant 0 : i32
    %c0_i32_0 = arith.constant 0 : i32
    %c0_i32_1 = arith.constant 0 : i32
    return %c0_i32, %c0_i32_0 : i32, i32
  }
  func.func @transform_6(%arg0: i32) -> (i32, i32) {
    %c0_i32 = arith.constant 0 : i32
    %c0_i32_0 = arith.constant 0 : i32
    %c0_i32_1 = arith.constant 0 : i32
    return %c0_i32, %c0_i32_0 : i32, i32
  }
  func.func @transform_7(%arg0: i32) -> (i32, i32) {
    %c0_i32 = arith.constant 0 : i32
    %c0_i32_0 = arith.constant 0 : i32
    return %c0_i32, %arg0 : i32, i32
  }
}

</mosaic_0001>

<llo_original>
// kernel: tpu_custom_call.1
$region0: #{tpu_custom_call.1}
  #allocation0 [shape = 'u32[]', space=smem, size = 0x4, offset = 0x4, fixed_abs, tag = 'smem constant byte address 0x4 - core index']
  #allocation1 [shape = 'u32[144,128]{1,0:T(1,128)}', space=vmem, size = 0x12000, scoped, tag = 'internal scratch']
  %s0 = inlined_call_operand.hbm [shape: bf16[2,4096], index: 0, kind: input, shape index: {}]
  %s1 = inlined_call_operand.vmem [shape: bf16[32,2], index: 1, kind: input, shape index: {}]
  %s2 = inlined_call_operand.hbm [shape: f32[32,512], index: 2, kind: input, shape index: {}]
  %s3 = inlined_call_operand.hbm [shape: bf16[5,32,32], index: 3, kind: input, shape index: {}]
  %s4 = inlined_call_operand.hbm [shape: f32[5,32,512], index: 4, kind: input, shape index: {}]
  %s5 = inlined_call_operand.vmem [shape: bf16[1,32], index: 5, kind: input, shape index: {}]
  %s6 = inlined_call_operand.vmem [shape: f32[1,512], index: 6, kind: input, shape index: {}]
  %s7 = inlined_call_operand.hbm [shape: f32[1,4096], index: 7, kind: output, shape index: {}]
  %s8 = sld [smem:[#allocation0]]
  $region77: #{tpu_custom_call.1} parent=0
    _
  %s10 = ssub.s32 1, %s8
  %s11 = scalar_select 0, %s10, %s8
  $region1: #{tpu_custom_call.1} parent=0
    #allocation2 [shape = 'u8[8192]{0}', space=vmem, size = 0x2000, scoped, tag = 'input window, operand 0']
    #allocation3 [shape = 's32[2]{0}', space=sflag, size = 0x8, scoped, tag = 'scoped memory for tpu_custom_call.1']
    #allocation4 [shape = 's32[2]{0}', space=sflag, size = 0x8, scoped, tag = 'scoped memory for tpu_custom_call.1']
    #allocation5 [shape = 'u8[65536]{0}', space=vmem, size = 0x10000, scoped, tag = 'input window, operand 2, single buffered']
    #allocation6 [shape = 's32[1]{0}', space=sflag, size = 0x4, scoped, tag = 'scoped memory for tpu_custom_call.1']
    #allocation7 [shape = 'u8[40960]{0}', space=vmem, size = 0xa000, scoped, tag = 'input window, operand 3, single buffered']
    #allocation8 [shape = 'u8[327680]{0}', space=vmem, size = 0x50000, scoped, tag = 'input window, operand 4, single buffered']
    #allocation9 [shape = 's32[1]{0}', space=sflag, size = 0x4, scoped, tag = 'scoped memory for tpu_custom_call.1']
    #allocation10 [shape = 'u8[8192]{0}', space=vmem, size = 0x2000, scoped, tag = 'output window, operand 0']
    %12 = vsyncpa [#allocation3], 0
    %s13 = scalar_lea.sflag [#allocation3], 1
    %14 = vsyncpa %s13, 0
    %15 = vsyncpa [#allocation6], 0
    %16 = vsyncpa [#allocation9], 0
    %17 = vsyncpa [#allocation4], 0
    %s18 = scalar_lea.sflag [#allocation4], 1
    %19 = vsyncpa %s18, 0
    loop: start=0, step=1, limit=6
    $region2: #{tpu_custom_call.1} parent=1 // loop_pre_header
      _
    $region3: #{tpu_custom_call.1} parent=1 // loop_header
      %s21 = sphi 0, %s25
      %p22 = scmp.ge.s32.totalorder %s21, 6
      %s31 = sphi 0, %s33
      %s34 = sphi 0, %s31
      %s35 = sphi 0, %s34
      %s51 = sphi 0, %s35
      %s55 = sphi 0, %s55
      %s57 = sphi 0, %s55
      %s58 = sphi 0, %s57
      %s72 = sphi 0, %s58
      %s76 = sphi 0, %s76
      %s78 = sphi 0, %s76
      %s79 = sphi 0, %s78
      %s93 = sphi 0, %s79
      %s97 = sphi 0, %s97
      %s99 = sphi 0, %s97
      %s100 = sphi 0, %s99
      %s114 = sphi 0, %s100
      %s118 = sphi 0, %s118
      %s120 = sphi 0, %s118
      %s121 = sphi 0, %s120
      %s135 = sphi 0, %s121
      %s139 = sphi 0, %s139
      %s141 = sphi 0, %s139
      %s142 = sphi 0, %s141
      %s156 = sphi 0, %s142
      %s160 = sphi 0, %s160
      %s162 = sphi 0, %s160
      %s163 = sphi 0, %s162
      %s177 = sphi 0, %s163
      %s183 = sphi 0, %s185
      %s186 = sphi 0, %s183
      %s187 = sphi 0, %s186
      %s203 = sphi 0, %s187
    $region4: #{tpu_custom_call.1} parent=1 // loop_header_branch
      %24 = sbr.rel (%p22) target = $region8
    $region5: #{tpu_custom_call.1} parent=1 // loop_body
      %s26 = ssub.s32 %s21, 1
      %s27 = ssub.s32 %s21, 2
      %s28 = sadd.s32 %s21, 1
      %s29 = ssub.s32 %s21, %s28
      %p30 = scmp.eq.s32.totalorder %s29, 0
      %s32 = sadd.s32 %s31, 1
      %s33 = scalar_select %p30, %s31, %s32
      %p36 = pneg %p30
      %p37 = scmp.eq.s32.totalorder %s21, 3
      %p38 = por %p36, %p37
      %p39 = scmp.ne.s32.totalorder %s31, %s34
      %p40 = scmp.eq.s32.totalorder %s21, 0
      %p41 = por %p39, %p40
      %p42 = scmp.ne.s32.totalorder %s31, %s34
      %p43 = scmp.eq.s32.totalorder %s26, 3
      %p44 = por %p42, %p43
      %p45 = scmp.ne.s32.totalorder %s34, %s35
      %p46 = scmp.eq.s32.totalorder %s26, 0
      %p47 = por %p45, %p46
      %p48 = scmp.ne.s32.totalorder %s34, %s35
      %p49 = scmp.eq.s32.totalorder %s27, 3
      %p50 = por %p48, %p49
      %p52 = scmp.ne.s32.totalorder %s35, %s51
      %p53 = scmp.eq.s32.totalorder %s27, 0
      %p54 = por %p52, %p53
      %s56 = sadd.s32 %s55, 1
      %p59 = scmp.eq.s32.totalorder %s21, 3
      %p60 = scmp.ne.s32.totalorder %s55, %s57
      %p61 = scmp.eq.s32.totalorder %s21, 0
      %p62 = por %p60, %p61
      %p63 = scmp.ne.s32.totalorder %s55, %s57
      %p64 = scmp.eq.s32.totalorder %s26, 3
      %p65 = por %p63, %p64
      %p66 = scmp.ne.s32.totalorder %s57, %s58
      %p67 = scmp.eq.s32.totalorder %s26, 0
      %p68 = por %p66, %p67
      %p69 = scmp.ne.s32.totalorder %s57, %s58
      %p70 = scmp.eq.s32.totalorder %s27, 3
      %p71 = por %p69, %p70
      %p73 = scmp.ne.s32.totalorder %s58, %s72
      %p74 = scmp.eq.s32.totalorder %s27, 0
      %p75 = por %p73, %p74
      %s77 = sadd.s32 %s76, 1
      %p80 = scmp.eq.s32.totalorder %s21, 3
      %p81 = scmp.ne.s32.totalorder %s76, %s78
      %p82 = scmp.eq.s32.totalorder %s21, 0
      %p83 = por %p81, %p82
      %p84 = scmp.ne.s32.totalorder %s76, %s78
      %p85 = scmp.eq.s32.totalorder %s26, 3
      %p86 = por %p84, %p85
      %p87 = scmp.ne.s32.totalorder %s78, %s79
      %p88 = scmp.eq.s32.totalorder %s26, 0
      %p89 = por %p87, %p88
      %p90 = scmp.ne.s32.totalorder %s78, %s79
      %p91 = scmp.eq.s32.totalorder %s27, 3
      %p92 = por %p90, %p91
      %p94 = scmp.ne.s32.totalorder %s79, %s93
      %p95 = scmp.eq.s32.totalorder %s27, 0
      %p96 = por %p94, %p95
      %s98 = sadd.s32 %s97, 1
      %p101 = scmp.eq.s32.totalorder %s21, 3
      %p102 = scmp.ne.s32.totalorder %s97, %s99
      %p103 = scmp.eq.s32.totalorder %s21, 0
      %p104 = por %p102, %p103
      %p105 = scmp.ne.s32.totalorder %s97, %s99
      %p106 = scmp.eq.s32.totalorder %s26, 3
      %p107 = por %p105, %p106
      %p108 = scmp.ne.s32.totalorder %s99, %s100
      %p109 = scmp.eq.s32.totalorder %s26, 0
      %p110 = por %p108, %p109
      %p111 = scmp.ne.s32.totalorder %s99, %s100
      %p112 = scmp.eq.s32.totalorder %s27, 3
      %p113 = por %p111, %p112
      %p115 = scmp.ne.s32.totalorder %s100, %s114
      %p116 = scmp.eq.s32.totalorder %s27, 0
      %p117 = por %p115, %p116
      %s119 = sadd.s32 %s118, 1
      %p122 = scmp.eq.s32.totalorder %s21, 3
      %p123 = scmp.ne.s32.totalorder %s118, %s120
      %p124 = scmp.eq.s32.totalorder %s21, 0
      %p125 = por %p123, %p124
      %p126 = scmp.ne.s32.totalorder %s118, %s120
      %p127 = scmp.eq.s32.totalorder %s26, 3
      %p128 = por %p126, %p127
      %p129 = scmp.ne.s32.totalorder %s120, %s121
      %p130 = scmp.eq.s32.totalorder %s26, 0
      %p131 = por %p129, %p130
      %p132 = scmp.ne.s32.totalorder %s120, %s121
      %p133 = scmp.eq.s32.totalorder %s27, 3
      %p134 = por %p132, %p133
      %p136 = scmp.ne.s32.totalorder %s121, %s135
      %p137 = scmp.eq.s32.totalorder %s27, 0
      %p138 = por %p136, %p137
      %s140 = sadd.s32 %s139, 1
      %p143 = scmp.eq.s32.totalorder %s21, 3
      %p144 = scmp.ne.s32.totalorder %s139, %s141
      %p145 = scmp.eq.s32.totalorder %s21, 0
      %p146 = por %p144, %p145
      %p147 = scmp.ne.s32.totalorder %s139, %s141
      %p148 = scmp.eq.s32.totalorder %s26, 3
      %p149 = por %p147, %p148
      %p150 = scmp.ne.s32.totalorder %s141, %s142
      %p151 = scmp.eq.s32.totalorder %s26, 0
      %p152 = por %p150, %p151
      %p153 = scmp.ne.s32.totalorder %s141, %s142
      %p154 = scmp.eq.s32.totalorder %s27, 3
      %p155 = por %p153, %p154
      %p157 = scmp.ne.s32.totalorder %s142, %s156
      %p158 = scmp.eq.s32.totalorder %s27, 0
      %p159 = por %p157, %p158
      %s161 = sadd.s32 %s160, 1
      %p164 = scmp.eq.s32.totalorder %s21, 3
      %p165 = scmp.ne.s32.totalorder %s160, %s162
      %p166 = scmp.eq.s32.totalorder %s21, 0
      %p167 = por %p165, %p166
      %p168 = scmp.ne.s32.totalorder %s160, %s162
      %p169 = scmp.eq.s32.totalorder %s26, 3
      %p170 = por %p168, %p169
      %p171 = scmp.ne.s32.totalorder %s162, %s163
      %p172 = scmp.eq.s32.totalorder %s26, 0
      %p173 = por %p171, %p172
      %p174 = scmp.ne.s32.totalorder %s162, %s163
      %p175 = scmp.eq.s32.totalorder %s27, 3
      %p176 = por %p174, %p175
      %p178 = scmp.ne.s32.totalorder %s163, %s177
      %p179 = scmp.eq.s32.totalorder %s27, 0
      %p180 = por %p178, %p179
      %s181 = ssub.s32 %s21, %s28
      %p182 = scmp.eq.s32.totalorder %s181, 0
      %s184 = sadd.s32 %s183, 1
      %s185 = scalar_select %p182, %s183, %s184
      %p188 = pneg %p182
      %p189 = scmp.eq.s32.totalorder %s21, 3
      %p190 = por %p188, %p189
      %p191 = scmp.ne.s32.totalorder %s183, %s186
      %p192 = scmp.eq.s32.totalorder %s21, 0
      %p193 = por %p191, %p192
      %p194 = scmp.ne.s32.totalorder %s183, %s186
      %p195 = scmp.eq.s32.totalorder %s26, 3
      %p196 = por %p194, %p195
      %p197 = scmp.ne.s32.totalorder %s186, %s187
      %p198 = scmp.eq.s32.totalorder %s26, 0
      %p199 = por %p197, %p198
      %p200 = scmp.ne.s32.totalorder %s186, %s187
      %p201 = scmp.eq.s32.totalorder %s27, 3
      %p202 = por %p200, %p201
      %p204 = scmp.ne.s32.totalorder %s187, %s203
      %p205 = scmp.eq.s32.totalorder %s27, 0
      %p206 = por %p204, %p205
      %p207 = scmp.le.s32.totalorder 1, %s21
      %p208 = scmp.lt.s32.totalorder %s21, 5
      %p209 = pnand %p207, %p208
      %p210 = pneg %p209
      // Predicated region
      $region9: #{tpu_custom_call.1} parent=5 // pred_check
        _
      $region10: #{tpu_custom_call.1} parent=5 // pred_check_branch
        %212 = sbr.rel (%p209) target = $region12
      $region11: #{tpu_custom_call.1} parent=5 // pred_region
        %s213 = ssub.s32 %s21, 1
        // Predicated region
        $region13: #{tpu_custom_call.1} parent=11 // pred_check
          %p214 = pneg %p68
        $region14: #{tpu_custom_call.1} parent=11 // pred_check_branch
          %216 = sbr.rel (%p214) target = $region16
        $region15: #{tpu_custom_call.1} parent=11 // pred_region
          _
        $region16: #{tpu_custom_call.1} parent=11 // pred_fallthru
          _
        // Predicated region
        $region17: #{tpu_custom_call.1} parent=11 // pred_check
          %p217 = pneg %p89
        $region18: #{tpu_custom_call.1} parent=11 // pred_check_branch
          %219 = sbr.rel (%p217) target = $region20
        $region19: #{tpu_custom_call.1} parent=11 // pred_region
          %s221 = ssub.s32 2048, 2048
          %222 = vsyncadd [#allocation6], %s221
          %s223 = sshll.u32 [#allocation5], 4
          %s224 = int_to_ptr.vmem [resolvable:$true] %s223
          %229 = dma.hbm_to_vmem [thread:$0]  %s2, 2048, %s224, [#allocation6], 512, 512, 32
        $region20: #{tpu_custom_call.1} parent=11 // pred_fallthru
          _
        // Predicated region
        $region21: #{tpu_custom_call.1} parent=11 // pred_check
          %p230 = pneg %p110
        $region22: #{tpu_custom_call.1} parent=11 // pred_check_branch
          %232 = sbr.rel (%p230) target = $region24
        $region23: #{tpu_custom_call.1} parent=11 // pred_region
          %s234 = ssub.s32 1280, 1280
          %235 = vsyncadd [#allocation6], %s234
          %s236 = sshll.u32 [#allocation7], 4
          %s237 = int_to_ptr.vmem [resolvable:$true] %s236
          %242 = dma.hbm_to_vmem [thread:$0]  %s3, 1280, %s237, [#allocation6], 64, 64, 4
        $region24: #{tpu_custom_call.1} parent=11 // pred_fallthru
          _
        // Predicated region
        $region25: #{tpu_custom_call.1} parent=11 // pred_check
          %p243 = pneg %p131
        $region26: #{tpu_custom_call.1} parent=11 // pred_check_branch
          %245 = sbr.rel (%p243) target = $region28
        $region27: #{tpu_custom_call.1} parent=11 // pred_region
          %s247 = ssub.s32 10240, 10240
          %248 = vsyncadd [#allocation9], %s247
          %s249 = sshll.u32 [#allocation8], 4
          %s250 = int_to_ptr.vmem [resolvable:$true] %s249
          %255 = dma.hbm_to_vmem [thread:$0]  %s4, 10240, %s250, [#allocation9], 512, 512, 32
        $region28: #{tpu_custom_call.1} parent=11 // pred_fallthru
          _
        // Predicated region
        $region29: #{tpu_custom_call.1} parent=11 // pred_check
          %p256 = pneg %p152
        $region30: #{tpu_custom_call.1} parent=11 // pred_check_branch
          %258 = sbr.rel (%p256) target = $region32
        $region31: #{tpu_custom_call.1} parent=11 // pred_region
          _
        $region32: #{tpu_custom_call.1} parent=11 // pred_fallthru
          _
        // Predicated region
        $region33: #{tpu_custom_call.1} parent=11 // pred_check
          %p259 = pneg %p173
        $region34: #{tpu_custom_call.1} parent=11 // pred_check_branch
          %261 = sbr.rel (%p259) target = $region36
        $region35: #{tpu_custom_call.1} parent=11 // pred_region
          _
        $region36: #{tpu_custom_call.1} parent=11 // pred_fallthru
          _
      $region12: #{tpu_custom_call.1} parent=5 // pred_fallthru
        _
      %p262 = scmp.lt.s32.totalorder %s21, 4
      // Predicated region
      $region37: #{tpu_custom_call.1} parent=5 // pred_check
        %p263 = pneg %p262
      $region38: #{tpu_custom_call.1} parent=5 // pred_check_branch
        %265 = sbr.rel (%p263) target = $region40
      $region39: #{tpu_custom_call.1} parent=5 // pred_region
        // Predicated region
        $region41: #{tpu_custom_call.1} parent=39 // pred_check
          %p266 = pneg %p41
        $region42: #{tpu_custom_call.1} parent=39 // pred_check_branch
          %268 = sbr.rel (%p266) target = $region44
        $region43: #{tpu_custom_call.1} parent=39 // pred_region
          %s269 = sand.u32 %s31, 1
          %s270 = scalar_lea.sflag [#allocation3], %s269
          %s271 = sand.u32 %s31, 1
          %s272 = smul.addr %s271, 8
          %s273 = scalar_lea.vmem [#allocation2], %s272
          %s274 = smul.u32 8, %s21
          %s276 = ssub.s32 128, 128
          %277 = vsyncadd %s270, %s276
          %s278 = smul.addr %s274, 16
          %s279 = scalar_lea.hbm %s0, %s278
          %s281 = sshll.u32 %s273, 4
          %s282 = int_to_ptr.vmem [resolvable:$true] %s281
          %284 = dma.hbm_to_vmem [thread:$0]  %s279, 128, %s282, %s270
        $region44: #{tpu_custom_call.1} parent=39 // pred_fallthru
          _
      $region40: #{tpu_custom_call.1} parent=5 // pred_fallthru
        _
      %p285 = scmp.le.s32.totalorder 1, %s21
      %p286 = scmp.lt.s32.totalorder %s21, 5
      %p287 = pnand %p285, %p286
      %p288 = pneg %p287
      // Predicated region
      $region45: #{tpu_custom_call.1} parent=5 // pred_check
        _
      $region46: #{tpu_custom_call.1} parent=5 // pred_check_branch
        %290 = sbr.rel (%p287) target = $region48
      $region47: #{tpu_custom_call.1} parent=5 // pred_region
        %s291 = ssub.s32 %s21, 1
        %s292 = sand.u32 %s34, 1
        %s293 = scalar_lea.sflag [#allocation3], %s292
        %s294 = sand.u32 %s34, 1
        %s295 = smul.addr %s294, 8
        %s296 = scalar_lea.vmem [#allocation2], %s295
        // Predicated region
        $region49: #{tpu_custom_call.1} parent=47 // pred_check
          %p297 = pneg %p47
        $region50: #{tpu_custom_call.1} parent=47 // pred_check_branch
          %299 = sbr.rel (%p297) target = $region52
        $region51: #{tpu_custom_call.1} parent=47 // pred_region
          %300 = dma.done %s293, 128
        $region52: #{tpu_custom_call.1} parent=47 // pred_fallthru
          _
        // Predicated region
        $region53: #{tpu_custom_call.1} parent=47 // pred_check
          %p301 = pneg %p89
        $region54: #{tpu_custom_call.1} parent=47 // pred_check_branch
          %303 = sbr.rel (%p301) target = $region56
        $region55: #{tpu_custom_call.1} parent=47 // pred_region
          %304 = dma.done [#allocation6], 2048
        $region56: #{tpu_custom_call.1} parent=47 // pred_fallthru
          _
        // Predicated region
        $region57: #{tpu_custom_call.1} parent=47 // pred_check
          %p305 = pneg %p110
        $region58: #{tpu_custom_call.1} parent=47 // pred_check_branch
          %307 = sbr.rel (%p305) target = $region60
        $region59: #{tpu_custom_call.1} parent=47 // pred_region
          %308 = dma.done [#allocation6], 1280
        $region60: #{tpu_custom_call.1} parent=47 // pred_fallthru
          _
        // Predicated region
        $region61: #{tpu_custom_call.1} parent=47 // pred_check
          %p309 = pneg %p131
        $region62: #{tpu_custom_call.1} parent=47 // pred_check_branch
          %311 = sbr.rel (%p309) target = $region64
        $region63: #{tpu_custom_call.1} parent=47 // pred_region
          %312 = dma.done [#allocation9], 10240
        $region64: #{tpu_custom_call.1} parent=47 // pred_fallthru
          _
        %s313 = sand.u32 %s34, 1
        %s314 = scalar_lea.sflag [#allocation3], %s313
        %s315 = sand.u32 %s34, 1
        %s316 = smul.addr %s315, 8
        %s317 = scalar_lea.vmem [#allocation2], %s316
        %p318 = pneg %p47
        %p319 = pneg %p44
        %p320 = pneg %p68
        %p321 = pneg %p65
        %p322 = pneg %p89
        %p323 = pneg %p86
        %p324 = pneg %p110
        %p325 = pneg %p107
        %p326 = pneg %p131
        %p327 = pneg %p128
        %p328 = pneg %p152
        %p329 = pneg %p149
        %p330 = pneg %p173
        %p331 = pneg %p170
        %p332 = pneg %p199
        %p333 = pneg %p196
        %s334 = sand.u32 %s186, 1
        %s335 = scalar_lea.sflag [#allocation4], %s334
        %s336 = sand.u32 %s186, 1
        %s337 = smul.addr %s336, 8
        %s338 = scalar_lea.vmem [#allocation10], %s337
        %s339 = smul.u32 8, %s26
        %s340 = smul.u32 8, %s26
        %v342 = vld [vmem:[%s1] sm:$0xf]
        %v343 = vld [vmem:[%s1 + $0x4] sm:$0xf]
        %v344 = vld [vmem:[%s1 + $0x8] sm:$0xf]
        %v345 = vld [vmem:[%s1 + $0xc] sm:$0xf]
        %v346 = vld [vmem:[%s296] sm:$0xf]
        %v347 = vld [vmem:[#allocation5] sm:$0xff]
        %v348 = vld [vmem:[#allocation5 + $0x8] sm:$0xff]
        %v349 = vld [vmem:[#allocation5 + $0x10] sm:$0xff]
        %v350 = vld [vmem:[#allocation5 + $0x18] sm:$0xff]
        %v351 = vld [vmem:[#allocation5 + $0x20] sm:$0xff]
        %v352 = vld [vmem:[#allocation5 + $0x28] sm:$0xff]
        %v353 = vld [vmem:[#allocation5 + $0x30] sm:$0xff]
        %v354 = vld [vmem:[#allocation5 + $0x38] sm:$0xff]
        %v355 = vld [vmem:[#allocation5 + $0x40] sm:$0xff]
        %v356 = vld [vmem:[#allocation5 + $0x48] sm:$0xff]
        %v357 = vld [vmem:[#allocation5 + $0x50] sm:$0xff]
        %v358 = vld [vmem:[#allocation5 + $0x58] sm:$0xff]
        %v359 = vld [vmem:[#allocation5 + $0x60] sm:$0xff]
        %v360 = vld [vmem:[#allocation5 + $0x68] sm:$0xff]
        %v361 = vld [vmem:[#allocation5 + $0x70] sm:$0xff]
        %v362 = vld [vmem:[#allocation5 + $0x78] sm:$0xff]
        %v367 = vunpack.c.l.b16 %v342
        %v368 = vunpack.c.l.b16 %v343
        %v369 = vunpack.c.l.b16 %v344
        %v370 = vunpack.c.l.b16 %v345
        %v371 = vpack.c.b16 %v368, %v367
        %v372 = vpack.c.b16 %v370, %v369
        %v375 = vunpack.c.l.s4 1966171168
        %v376 = vunpack.c.0.s8 %v375
        %v377 = vlaneseq
        %v378 = vshrl.u32 %v377, 7
        %v379 = vsub.s32 %v376, %v378
        %v380 = vrot.slane %v346, %v379
        %v381 = vcombine.high %v380, %v380
        %v383 = vunpack.c.l.s4 1966171168
        %v384 = vunpack.c.0.s8 %v383
        %v385 = vlaneseq
        %v386 = vshrl.u32 %v385, 7
        %v387 = vsub.s32 %v384, %v386
        %v388 = vrot.slane %v380, %v387
        %v390 = vunpack.c.l.s4 1966171168
        %v391 = vunpack.c.0.s8 %v390
        %v392 = vlaneseq
        %v393 = vshrl.u32 %v392, 7
        %v394 = vsub.s32 %v391, %v393
        %v395 = vrot.slane %v381, %v394
        %v396 = vcombine.high %v388, %v388
        %v397 = vcombine.high %v395, %v395
        %vm398 = vcmask 15360
        %v400 = vsel %vm398, %v371, 0
        %v403 = vsel %vm398, %v372, 0
        %vm405 = vcmask 1040384
        %v407 = vsel %vm405, %v388, 0
        %v410 = vsel %vm405, %v395, 0
        %v413 = vsel %vm405, %v396, 0
        %v416 = vsel %vm405, %v397, 0
        %418 = vmatprep.subr.bf16.mxu0 %v410
        %419 = vmatpush1.bf16.msra.mxu0 %v407
        %420 = vmatprep.subr.bf16.mxu0 0
        %421 = vmatpush1.bf16.msra.mxu0 0
        %422 = vmatprep.subr.bf16.mxu0 0
        %423 = vmatpush1.bf16.msra.mxu0 0
        %424 = vmatprep.subr.bf16.mxu0 0
        %425 = vmatpush1.bf16.msra.mxu0 0
        %426 = vmatprep.subr.bf16.mxu0 0
        %427 = vmatpush1.bf16.msra.mxu0 0
        %428 = vmatprep.subr.bf16.mxu0 0
        %429 = vmatpush1.bf16.msra.mxu0 0
        %430 = vmatprep.subr.bf16.mxu0 0
        %431 = vmatpush1.bf16.msra.mxu0 0
        %432 = vmatprep.subr.bf16.mxu0 0
        %433 = vmatpush1.bf16.msra.mxu0 0
        %434 = vmatprep.subr.bf16.mxu0 0
        %435 = vmatpush1.bf16.msra.mxu0 0
        %436 = vmatprep.subr.bf16.mxu0 0
        %437 = vmatpush1.bf16.msra.mxu0 0
        %438 = vmatprep.subr.bf16.mxu0 0
        %439 = vmatpush1.bf16.msra.mxu0 0
        %440 = vmatprep.subr.bf16.mxu0 0
        %441 = vmatpush1.bf16.msra.mxu0 0
        %442 = vmatprep.subr.bf16.mxu0 0
        %443 = vmatpush1.bf16.msra.mxu0 0
        %444 = vmatprep.subr.bf16.mxu0 0
        %445 = vmatpush1.bf16.msra.mxu0 0
        %446 = vmatprep.subr.bf16.mxu0 0
        %447 = vmatpush1.bf16.msra.mxu0 0
        %448 = vmatprep.subr.bf16.mxu0 0
        %449 = vmatpush1.bf16.msra.mxu0 0
        %450 = vmatprep.mubr.bf16.mxu0 0
        %451 = vmatmul.mubr.bf16.gmra.mrb[0].mxu0 %v400
        %v452 = vpop.f32.mrb[0].mxu0
        %v453 = vadd.f32 %v347, %v452
        %v454 = vpop.f32.mrb[0].mxu0
        %v455 = vadd.f32 %v348, %v454
        %v456 = vpop.f32.mrb[0].mxu0
        %v457 = vadd.f32 %v351, %v456
        %v458 = vpop.f32.mrb[0].mxu0
        %v459 = vadd.f32 %v352, %v458
        %460 = vmatprep.mubr.bf16.mxu0 0
        %461 = vmatmul.mubr.bf16.gmra.mrb[0].mxu0 %v403
        %v462 = vpop.f32.mrb[0].mxu0
        %v463 = vadd.f32 %v355, %v462
        %v464 = vpop.f32.mrb[0].mxu0
        %v465 = vadd.f32 %v356, %v464
        %v466 = vpop.f32.mrb[0].mxu0
        %v467 = vadd.f32 %v359, %v466
        %v468 = vpop.f32.mrb[0].mxu0
        %v469 = vadd.f32 %v360, %v468
        %470 = vdwg.mxu0
        %471 = vmatprep.subr.bf16.mxu0 %v416
        %472 = vmatpush1.bf16.msra.mxu0 %v413
        %473 = vmatprep.subr.bf16.mxu0 0
        %474 = vmatpush1.bf16.msra.mxu0 0
        %475 = vmatprep.subr.bf16.mxu0 0
        %476 = vmatpush1.bf16.msra.mxu0 0
        %477 = vmatprep.subr.bf16.mxu0 0
        %478 = vmatpush1.bf16.msra.mxu0 0
        %479 = vmatprep.subr.bf16.mxu0 0
        %480 = vmatpush1.bf16.msra.mxu0 0
        %481 = vmatprep.subr.bf16.mxu0 0
        %482 = vmatpush1.bf16.msra.mxu0 0
        %483 = vmatprep.subr.bf16.mxu0 0
        %484 = vmatpush1.bf16.msra.mxu0 0
        %485 = vmatprep.subr.bf16.mxu0 0
        %486 = vmatpush1.bf16.msra.mxu0 0
        %487 = vmatprep.subr.bf16.mxu0 0
        %488 = vmatpush1.bf16.msra.mxu0 0
        %489 = vmatprep.subr.bf16.mxu0 0
        %490 = vmatpush1.bf16.msra.mxu0 0
        %491 = vmatprep.subr.bf16.mxu0 0
        %492 = vmatpush1.bf16.msra.mxu0 0
        %493 = vmatprep.subr.bf16.mxu0 0
        %494 = vmatpush1.bf16.msra.mxu0 0
        %495 = vmatprep.subr.bf16.mxu0 0
        %496 = vmatpush1.bf16.msra.mxu0 0
        %497 = vmatprep.subr.bf16.mxu0 0
        %498 = vmatpush1.bf16.msra.mxu0 0
        %499 = vmatprep.subr.bf16.mxu0 0
        %500 = vmatpush1.bf16.msra.mxu0 0
        %501 = vmatprep.subr.bf16.mxu0 0
        %502 = vmatpush1.bf16.msra.mxu0 0
        %503 = vmatprep.mubr.bf16.mxu0 0
        %504 = vmatmul.mubr.bf16.gmra.mrb[0].mxu0 %v400
        %v505 = vpop.f32.mrb[0].mxu0
        %v506 = vadd.f32 %v349, %v505
        %v507 = vpop.f32.mrb[0].mxu0
        %v508 = vadd.f32 %v350, %v507
        %v509 = vpop.f32.mrb[0].mxu0
        %v510 = vadd.f32 %v353, %v509
        %v511 = vpop.f32.mrb[0].mxu0
        %v512 = vadd.f32 %v354, %v511
        %513 = vmatprep.mubr.bf16.mxu0 0
        %514 = vmatmul.mubr.bf16.gmra.mrb[0].mxu0 %v403
        %v515 = vpop.f32.mrb[0].mxu0
        %v516 = vadd.f32 %v357, %v515
        %v517 = vpop.f32.mrb[0].mxu0
        %v518 = vadd.f32 %v358, %v517
        %v519 = vpop.f32.mrb[0].mxu0
        %v520 = vadd.f32 %v361, %v519
        %v521 = vpop.f32.mrb[0].mxu0
        %v522 = vadd.f32 %v362, %v521
        %523 = vdwg.mxu0
        %v524 = vtanh.pop %v453
        %v525 = vtanh.pop %v455
        %v526 = vtanh.pop %v506
        %v527 = vtanh.pop %v508
        %v528 = vtanh.pop %v457
        %v529 = vtanh.pop %v459
        %v530 = vtanh.pop %v510
        %v531 = vtanh.pop %v512
        %v532 = vtanh.pop %v463
        %v533 = vtanh.pop %v465
        %v534 = vtanh.pop %v516
        %v535 = vtanh.pop %v518
        %v536 = vtanh.pop %v467
        %v537 = vtanh.pop %v469
        %v538 = vtanh.pop %v520
        %v539 = vtanh.pop %v522
        %v540 = vld [vmem:[#allocation7] sm:$0xf]
        %v541 = vld [vmem:[#allocation7 + $0x4] sm:$0xf]
        %v542 = vld [vmem:[#allocation7 + $0x8] sm:$0xf]
        %v543 = vld [vmem:[#allocation7 + $0xc] sm:$0xf]
        %v544 = vpack.c.bf16 %v528, %v524
        %v545 = vpack.c.bf16 %v529, %v525
        %v546 = vpack.c.bf16 %v530, %v526
        %v547 = vpack.c.bf16 %v531, %v527
        %v548 = vpack.c.bf16 %v536, %v532
        %v549 = vpack.c.bf16 %v537, %v533
        %v550 = vpack.c.bf16 %v538, %v534
        %v551 = vpack.c.bf16 %v539, %v535
        %v552 = vld [vmem:[#allocation8] sm:$0xff]
        %v553 = vld [vmem:[#allocation8 + $0x8] sm:$0xff]
        %v554 = vld [vmem:[#allocation8 + $0x10] sm:$0xff]
        %v555 = vld [vmem:[#allocation8 + $0x18] sm:$0xff]
        %v556 = vld [vmem:[#allocation8 + $0x20] sm:$0xff]
        %v557 = vld [vmem:[#allocation8 + $0x28] sm:$0xff]
        %v558 = vld [vmem:[#allocation8 + $0x30] sm:$0xff]
        %v559 = vld [vmem:[#allocation8 + $0x38] sm:$0xff]
        %v560 = vld [vmem:[#allocation8 + $0x40] sm:$0xff]
        %v561 = vld [vmem:[#allocation8 + $0x48] sm:$0xff]
        %v562 = vld [vmem:[#allocation8 + $0x50] sm:$0xff]
        %v563 = vld [vmem:[#allocation8 + $0x58] sm:$0xff]
        %v564 = vld [vmem:[#allocation8 + $0x60] sm:$0xff]
        %v565 = vld [vmem:[#allocation8 + $0x68] sm:$0xff]
        %v566 = vld [vmem:[#allocation8 + $0x70] sm:$0xff]
        %v567 = vld [vmem:[#allocation8 + $0x78] sm:$0xff]
        %v572 = vunpack.c.l.b16 %v540
        %v573 = vunpack.c.l.b16 %v541
        %v574 = vunpack.c.l.b16 %v542
        %v575 = vunpack.c.l.b16 %v543
        %v576 = vpack.c.b16 %v573, %v572
        %v577 = vpack.c.b16 %v575, %v574
        %vm578 = vcmask 261120
        %v580 = vsel %vm578, %v576, 0
        %v583 = vsel %vm578, %v577, 0
        %585 = vmatprep.subr.bf16.mxu0 %v545
        %586 = vmatpush1.bf16.msra.mxu0 %v544
        %587 = vmatprep.subr.bf16.mxu0 %v549
        %588 = vmatpush1.bf16.msra.mxu0 %v548
        %589 = vmatprep.subr.bf16.mxu0 0
        %590 = vmatpush1.bf16.msra.mxu0 0
        %591 = vmatprep.subr.bf16.mxu0 0
        %592 = vmatpush1.bf16.msra.mxu0 0
        %593 = vmatprep.subr.bf16.mxu0 0
        %594 = vmatpush1.bf16.msra.mxu0 0
        %595 = vmatprep.subr.bf16.mxu0 0
        %596 = vmatpush1.bf16.msra.mxu0 0
        %597 = vmatprep.subr.bf16.mxu0 0
        %598 = vmatpush1.bf16.msra.mxu0 0
        %599 = vmatprep.subr.bf16.mxu0 0
        %600 = vmatpush1.bf16.msra.mxu0 0
        %601 = vmatprep.subr.bf16.mxu0 0
        %602 = vmatpush1.bf16.msra.mxu0 0
        %603 = vmatprep.subr.bf16.mxu0 0
        %604 = vmatpush1.bf16.msra.mxu0 0
        %605 = vmatprep.subr.bf16.mxu0 0
        %606 = vmatpush1.bf16.msra.mxu0 0
        %607 = vmatprep.subr.bf16.mxu0 0
        %608 = vmatpush1.bf16.msra.mxu0 0
        %609 = vmatprep.subr.bf16.mxu0 0
        %610 = vmatpush1.bf16.msra.mxu0 0
        %611 = vmatprep.subr.bf16.mxu0 0
        %612 = vmatpush1.bf16.msra.mxu0 0
        %613 = vmatprep.subr.bf16.mxu0 0
        %614 = vmatpush1.bf16.msra.mxu0 0
        %615 = vmatprep.subr.bf16.mxu0 0
        %616 = vmatpush1.bf16.msra.mxu0 0
        %617 = vmatprep.mubr.bf16.mxu0 0
        %618 = vmatmul.mubr.bf16.gmra.mrb[0].mxu0 %v580
        %v619 = vpop.f32.mrb[0].mxu0
        %v620 = vadd.f32 %v552, %v619
        %v621 = vpop.f32.mrb[0].mxu0
        %v622 = vadd.f32 %v553, %v621
        %v623 = vpop.f32.mrb[0].mxu0
        %v624 = vadd.f32 %v556, %v623
        %v625 = vpop.f32.mrb[0].mxu0
        %v626 = vadd.f32 %v557, %v625
        %627 = vmatprep.mubr.bf16.mxu0 0
        %628 = vmatmul.mubr.bf16.gmra.mrb[0].mxu0 %v583
        %v629 = vpop.f32.mrb[0].mxu0
        %v630 = vadd.f32 %v560, %v629
        %v631 = vpop.f32.mrb[0].mxu0
        %v632 = vadd.f32 %v561, %v631
        %v633 = vpop.f32.mrb[0].mxu0
        %v634 = vadd.f32 %v564, %v633
        %v635 = vpop.f32.mrb[0].mxu0
        %v636 = vadd.f32 %v565, %v635
        %637 = vdwg.mxu0
        %638 = vmatprep.subr.bf16.mxu0 %v547
        %639 = vmatpush1.bf16.msra.mxu0 %v546
        %640 = vmatprep.subr.bf16.mxu0 %v551
        %641 = vmatpush1.bf16.msra.mxu0 %v550
        %642 = vmatprep.subr.bf16.mxu0 0
        %643 = vmatpush1.bf16.msra.mxu0 0
        %644 = vmatprep.subr.bf16.mxu0 0
        %645 = vmatpush1.bf16.msra.mxu0 0
        %646 = vmatprep.subr.bf16.mxu0 0
        %647 = vmatpush1.bf16.msra.mxu0 0
        %648 = vmatprep.subr.bf16.mxu0 0
        %649 = vmatpush1.bf16.msra.mxu0 0
        %650 = vmatprep.subr.bf16.mxu0 0
        %651 = vmatpush1.bf16.msra.mxu0 0
        %652 = vmatprep.subr.bf16.mxu0 0
        %653 = vmatpush1.bf16.msra.mxu0 0
        %654 = vmatprep.subr.bf16.mxu0 0
        %655 = vmatpush1.bf16.msra.mxu0 0
        %656 = vmatprep.subr.bf16.mxu0 0
        %657 = vmatpush1.bf16.msra.mxu0 0
        %658 = vmatprep.subr.bf16.mxu0 0
        %659 = vmatpush1.bf16.msra.mxu0 0
        %660 = vmatprep.subr.bf16.mxu0 0
        %661 = vmatpush1.bf16.msra.mxu0 0
        %662 = vmatprep.subr.bf16.mxu0 0
        %663 = vmatpush1.bf16.msra.mxu0 0
        %664 = vmatprep.subr.bf16.mxu0 0
        %665 = vmatpush1.bf16.msra.mxu0 0
        %666 = vmatprep.subr.bf16.mxu0 0
        %667 = vmatpush1.bf16.msra.mxu0 0
        %668 = vmatprep.subr.bf16.mxu0 0
        %669 = vmatpush1.bf16.msra.mxu0 0
        %670 = vmatprep.mubr.bf16.mxu0 0
        %671 = vmatmul.mubr.bf16.gmra.mrb[0].mxu0 %v580
        %v672 = vpop.f32.mrb[0].mxu0
        %v673 = vadd.f32 %v554, %v672
        %v674 = vpop.f32.mrb[0].mxu0
        %v675 = vadd.f32 %v555, %v674
        %v676 = vpop.f32.mrb[0].mxu0
        %v677 = vadd.f32 %v558, %v676
        %v678 = vpop.f32.mrb[0].mxu0
        %v679 = vadd.f32 %v559, %v678
        %680 = vmatprep.mubr.bf16.mxu0 0
        %681 = vmatmul.mubr.bf16.gmra.mrb[0].mxu0 %v583
        %v682 = vpop.f32.mrb[0].mxu0
        %v683 = vadd.f32 %v562, %v682
        %v684 = vpop.f32.mrb[0].mxu0
        %v685 = vadd.f32 %v563, %v684
        %v686 = vpop.f32.mrb[0].mxu0
        %v687 = vadd.f32 %v566, %v686
        %v688 = vpop.f32.mrb[0].mxu0
        %v689 = vadd.f32 %v567, %v688
        %690 = vdwg.mxu0
        %v691 = vtanh.pop %v620
        %v692 = vtanh.pop %v622
        %v693 = vtanh.pop %v673
        %v694 = vtanh.pop %v675
        %v695 = vtanh.pop %v624
        %v696 = vtanh.pop %v626
        %v697 = vtanh.pop %v677
        %v698 = vtanh.pop %v679
        %v699 = vtanh.pop %v630
        %v700 = vtanh.pop %v632
        %v701 = vtanh.pop %v683
        %v702 = vtanh.pop %v685
        %v703 = vtanh.pop %v634
        %v704 = vtanh.pop %v636
        %v705 = vtanh.pop %v687
        %v706 = vtanh.pop %v689
        %s707 = scalar_lea.vmem [#allocation7], 16
        %v708 = vld [vmem:[%s707] sm:$0xf]
        %v709 = vld [vmem:[%s707 + $0x4] sm:$0xf]
        %v710 = vld [vmem:[%s707 + $0x8] sm:$0xf]
        %v711 = vld [vmem:[%s707 + $0xc] sm:$0xf]
        %v712 = vpack.c.bf16 %v695, %v691
        %v713 = vpack.c.bf16 %v696, %v692
        %v714 = vpack.c.bf16 %v697, %v693
        %v715 = vpack.c.bf16 %v698, %v694
        %v716 = vpack.c.bf16 %v703, %v699
        %v717 = vpack.c.bf16 %v704, %v700
        %v718 = vpack.c.bf16 %v705, %v701
        %v719 = vpack.c.bf16 %v706, %v702
        %s720 = scalar_lea.vmem [#allocation8], 128
        %v721 = vld [vmem:[%s720] sm:$0xff]
        %v722 = vld [vmem:[%s720 + $0x8] sm:$0xff]
        %v723 = vld [vmem:[%s720 + $0x10] sm:$0xff]
        %v724 = vld [vmem:[%s720 + $0x18] sm:$0xff]
        %v725 = vld [vmem:[%s720 + $0x20] sm:$0xff]
        %v726 = vld [vmem:[%s720 + $0x28] sm:$0xff]
        %v727 = vld [vmem:[%s720 + $0x30] sm:$0xff]
        %v728 = vld [vmem:[%s720 + $0x38] sm:$0xff]
        %v729 = vld [vmem:[%s720 + $0x40] sm:$0xff]
        %v730 = vld [vmem:[%s720 + $0x48] sm:$0xff]
        %v731 = vld [vmem:[%s720 + $0x50] sm:$0xff]
        %v732 = vld [vmem:[%s720 + $0x58] sm:$0xff]
        %v733 = vld [vmem:[%s720 + $0x60] sm:$0xff]
        %v734 = vld [vmem:[%s720 + $0x68] sm:$0xff]
        %v735 = vld [vmem:[%s720 + $0x70] sm:$0xff]
        %v736 = vld [vmem:[%s720 + $0x78] sm:$0xff]
        %v741 = vunpack.c.l.b16 %v708
        %v742 = vunpack.c.l.b16 %v709
        %v743 = vunpack.c.l.b16 %v710
        %v744 = vunpack.c.l.b16 %v711
        %v745 = vpack.c.b16 %v742, %v741
        %v746 = vpack.c.b16 %v744, %v743
        %v748 = vsel %vm578, %v745, 0
        %v751 = vsel %vm578, %v746, 0
        %753 = vmatprep.subr.bf16.mxu0 %v713
        %754 = vmatpush1.bf16.msra.mxu0 %v712
        %755 = vmatprep.subr.bf16.mxu0 %v717
        %756 = vmatpush1.bf16.msra.mxu0 %v716
        %757 = vmatprep.subr.bf16.mxu0 0
        %758 = vmatpush1.bf16.msra.mxu0 0
        %759 = vmatprep.subr.bf16.mxu0 0
        %760 = vmatpush1.bf16.msra.mxu0 0
        %761 = vmatprep.subr.bf16.mxu0 0
        %762 = vmatpush1.bf16.msra.mxu0 0
        %763 = vmatprep.subr.bf16.mxu0 0
        %764 = vmatpush1.bf16.msra.mxu0 0
        %765 = vmatprep.subr.bf16.mxu0 0
        %766 = vmatpush1.bf16.msra.mxu0 0
        %767 = vmatprep.subr.bf16.mxu0 0
        %768 = vmatpush1.bf16.msra.mxu0 0
        %769 = vmatprep.subr.bf16.mxu0 0
        %770 = vmatpush1.bf16.msra.mxu0 0
        %771 = vmatprep.subr.bf16.mxu0 0
        %772 = vmatpush1.bf16.msra.mxu0 0
        %773 = vmatprep.subr.bf16.mxu0 0
        %774 = vmatpush1.bf16.msra.mxu0 0
        %775 = vmatprep.subr.bf16.mxu0 0
        %776 = vmatpush1.bf16.msra.mxu0 0
        %777 = vmatprep.subr.bf16.mxu0 0
        %778 = vmatpush1.bf16.msra.mxu0 0
        %779 = vmatprep.subr.bf16.mxu0 0
        %780 = vmatpush1.bf16.msra.mxu0 0
        %781 = vmatprep.subr.bf16.mxu0 0
        %782 = vmatpush1.bf16.msra.mxu0 0
        %783 = vmatprep.subr.bf16.mxu0 0
        %784 = vmatpush1.bf16.msra.mxu0 0
        %785 = vmatprep.mubr.bf16.mxu0 0
        %786 = vmatmul.mubr.bf16.gmra.mrb[0].mxu0 %v748
        %v787 = vpop.f32.mrb[0].mxu0
        %v788 = vadd.f32 %v721, %v787
        %v789 = vpop.f32.mrb[0].mxu0
        %v790 = vadd.f32 %v722, %v789
        %v791 = vpop.f32.mrb[0].mxu0
        %v792 = vadd.f32 %v725, %v791
        %v793 = vpop.f32.mrb[0].mxu0
        %v794 = vadd.f32 %v726, %v793
        %795 = vmatprep.mubr.bf16.mxu0 0
        %796 = vmatmul.mubr.bf16.gmra.mrb[0].mxu0 %v751
        %v797 = vpop.f32.mrb[0].mxu0
        %v798 = vadd.f32 %v729, %v797
        %v799 = vpop.f32.mrb[0].mxu0
        %v800 = vadd.f32 %v730, %v799
        %v801 = vpop.f32.mrb[0].mxu0
        %v802 = vadd.f32 %v733, %v801
        %v803 = vpop.f32.mrb[0].mxu0
        %v804 = vadd.f32 %v734, %v803
        %805 = vdwg.mxu0
        %806 = vmatprep.subr.bf16.mxu0 %v715
        %807 = vmatpush1.bf16.msra.mxu0 %v714
        %808 = vmatprep.subr.bf16.mxu0 %v719
        %809 = vmatpush1.bf16.msra.mxu0 %v718
        %810 = vmatprep.subr.bf16.mxu0 0
        %811 = vmatpush1.bf16.msra.mxu0 0
        %812 = vmatprep.subr.bf16.mxu0 0
        %813 = vmatpush1.bf16.msra.mxu0 0
        %814 = vmatprep.subr.bf16.mxu0 0
        %815 = vmatpush1.bf16.msra.mxu0 0
        %816 = vmatprep.subr.bf16.mxu0 0
        %817 = vmatpush1.bf16.msra.mxu0 0
        %818 = vmatprep.subr.bf16.mxu0 0
        %819 = vmatpush1.bf16.msra.mxu0 0
        %820 = vmatprep.subr.bf16.mxu0 0
        %821 = vmatpush1.bf16.msra.mxu0 0
        %822 = vmatprep.subr.bf16.mxu0 0
        %823 = vmatpush1.bf16.msra.mxu0 0
        %824 = vmatprep.subr.bf16.mxu0 0
        %825 = vmatpush1.bf16.msra.mxu0 0
        %826 = vmatprep.subr.bf16.mxu0 0
        %827 = vmatpush1.bf16.msra.mxu0 0
        %828 = vmatprep.subr.bf16.mxu0 0
        %829 = vmatpush1.bf16.msra.mxu0 0
        %830 = vmatprep.subr.bf16.mxu0 0
        %831 = vmatpush1.bf16.msra.mxu0 0
        %832 = vmatprep.subr.bf16.mxu0 0
        %833 = vmatpush1.bf16.msra.mxu0 0
        %834 = vmatprep.subr.bf16.mxu0 0
        %835 = vmatpush1.bf16.msra.mxu0 0
        %836 = vmatprep.subr.bf16.mxu0 0
        %837 = vmatpush1.bf16.msra.mxu0 0
        %838 = vmatprep.mubr.bf16.mxu0 0
        %839 = vmatmul.mubr.bf16.gmra.mrb[0].mxu0 %v748
        %v840 = vpop.f32.mrb[0].mxu0
        %v841 = vadd.f32 %v723, %v840
        %v842 = vpop.f32.mrb[0].mxu0
        %v843 = vadd.f32 %v724, %v842
        %v844 = vpop.f32.mrb[0].mxu0
        %v845 = vadd.f32 %v727, %v844
        %v846 = vpop.f32.mrb[0].mxu0
        %v847 = vadd.f32 %v728, %v846
        %848 = vmatprep.mubr.bf16.mxu0 0
        %849 = vmatmul.mubr.bf16.gmra.mrb[0].mxu0 %v751
        %v850 = vpop.f32.mrb[0].mxu0
        %v851 = vadd.f32 %v731, %v850
        %v852 = vpop.f32.mrb[0].mxu0
        %v853 = vadd.f32 %v732, %v852
        %v854 = vpop.f32.mrb[0].mxu0
        %v855 = vadd.f32 %v735, %v854
        %v856 = vpop.f32.mrb[0].mxu0
        %v857 = vadd.f32 %v736, %v856
        %858 = vdwg.mxu0
        %v859 = vtanh.pop %v788
        %v860 = vtanh.pop %v790
        %v861 = vtanh.pop %v841
        %v862 = vtanh.pop %v843
        %v863 = vtanh.pop %v792
        %v864 = vtanh.pop %v794
        %v865 = vtanh.pop %v845
        %v866 = vtanh.pop %v847
        %v867 = vtanh.pop %v798
        %v868 = vtanh.pop %v800
        %v869 = vtanh.pop %v851
        %v870 = vtanh.pop %v853
        %v871 = vtanh.pop %v802
        %v872 = vtanh.pop %v804
        %v873 = vtanh.pop %v855
        %v874 = vtanh.pop %v857
        %s875 = scalar_lea.vmem [#allocation7], 32
        %v876 = vld [vmem:[%s875] sm:$0xf]
        %v877 = vld [vmem:[%s875 + $0x4] sm:$0xf]
        %v878 = vld [vmem:[%s875 + $0x8] sm:$0xf]
        %v879 = vld [vmem:[%s875 + $0xc] sm:$0xf]
        %v880 = vpack.c.bf16 %v863, %v859
        %v881 = vpack.c.bf16 %v864, %v860
        %v882 = vpack.c.bf16 %v865, %v861
        %v883 = vpack.c.bf16 %v866, %v862
        %v884 = vpack.c.bf16 %v871, %v867
        %v885 = vpack.c.bf16 %v872, %v868
        %v886 = vpack.c.bf16 %v873, %v869
        %v887 = vpack.c.bf16 %v874, %v870
        %s888 = scalar_lea.vmem [#allocation8], 256
        %v889 = vld [vmem:[%s888] sm:$0xff]
        %v890 = vld [vmem:[%s888 + $0x8] sm:$0xff]
        %v891 = vld [vmem:[%s888 + $0x10] sm:$0xff]
        %v892 = vld [vmem:[%s888 + $0x18] sm:$0xff]
        %v893 = vld [vmem:[%s888 + $0x20] sm:$0xff]
        %v894 = vld [vmem:[%s888 + $0x28] sm:$0xff]
        %v895 = vld [vmem:[%s888 + $0x30] sm:$0xff]
        %v896 = vld [vmem:[%s888 + $0x38] sm:$0xff]
        %v897 = vld [vmem:[%s888 + $0x40] sm:$0xff]
        %v898 = vld [vmem:[%s888 + $0x48] sm:$0xff]
        %v899 = vld [vmem:[%s888 + $0x50] sm:$0xff]
        %v900 = vld [vmem:[%s888 + $0x58] sm:$0xff]
        %v901 = vld [vmem:[%s888 + $0x60] sm:$0xff]
        %v902 = vld [vmem:[%s888 + $0x68] sm:$0xff]
        %v903 = vld [vmem:[%s888 + $0x70] sm:$0xff]
        %v904 = vld [vmem:[%s888 + $0x78] sm:$0xff]
        %v909 = vunpack.c.l.b16 %v876
        %v910 = vunpack.c.l.b16 %v877
        %v911 = vunpack.c.l.b16 %v878
        %v912 = vunpack.c.l.b16 %v879
        %v913 = vpack.c.b16 %v910, %v909
        %v914 = vpack.c.b16 %v912, %v911
        %v916 = vsel %vm578, %v913, 0
        %v919 = vsel %vm578, %v914, 0
        %921 = vmatprep.subr.bf16.mxu0 %v881
        %922 = vmatpush1.bf16.msra.mxu0 %v880
        %923 = vmatprep.subr.bf16.mxu0 %v885
        %924 = vmatpush1.bf16.msra.mxu0 %v884
        %925 = vmatprep.subr.bf16.mxu0 0
        %926 = vmatpush1.bf16.msra.mxu0 0
        %927 = vmatprep.subr.bf16.mxu0 0
        %928 = vmatpush1.bf16.msra.mxu0 0
        %929 = vmatprep.subr.bf16.mxu0 0
        %930 = vmatpush1.bf16.msra.mxu0 0
        %931 = vmatprep.subr.bf16.mxu0 0
        %932 = vmatpush1.bf16.msra.mxu0 0
        %933 = vmatprep.subr.bf16.mxu0 0
        %934 = vmatpush1.bf16.msra.mxu0 0
        %935 = vmatprep.subr.bf16.mxu0 0
        %936 = vmatpush1.bf16.msra.mxu0 0
        %937 = vmatprep.subr.bf16.mxu0 0
        %938 = vmatpush1.bf16.msra.mxu0 0
        %939 = vmatprep.subr.bf16.mxu0 0
        %940 = vmatpush1.bf16.msra.mxu0 0
        %941 = vmatprep.subr.bf16.mxu0 0
        %942 = vmatpush1.bf16.msra.mxu0 0
        %943 = vmatprep.subr.bf16.mxu0 0
        %944 = vmatpush1.bf16.msra.mxu0 0
        %945 = vmatprep.subr.bf16.mxu0 0
        %946 = vmatpush1.bf16.msra.mxu0 0
        %947 = vmatprep.subr.bf16.mxu0 0
        %948 = vmatpush1.bf16.msra.mxu0 0
        %949 = vmatprep.subr.bf16.mxu0 0
        %950 = vmatpush1.bf16.msra.mxu0 0
        %951 = vmatprep.subr.bf16.mxu0 0
        %952 = vmatpush1.bf16.msra.mxu0 0
        %953 = vmatprep.mubr.bf16.mxu0 0
        %954 = vmatmul.mubr.bf16.gmra.mrb[0].mxu0 %v916
        %v955 = vpop.f32.mrb[0].mxu0
        %v956 = vadd.f32 %v889, %v955
        %v957 = vpop.f32.mrb[0].mxu0
        %v958 = vadd.f32 %v890, %v957
        %v959 = vpop.f32.mrb[0].mxu0
        %v960 = vadd.f32 %v893, %v959
        %v961 = vpop.f32.mrb[0].mxu0
        %v962 = vadd.f32 %v894, %v961
        %963 = vmatprep.mubr.bf16.mxu0 0
        %964 = vmatmul.mubr.bf16.gmra.mrb[0].mxu0 %v919
        %v965 = vpop.f32.mrb[0].mxu0
        %v966 = vadd.f32 %v897, %v965
        %v967 = vpop.f32.mrb[0].mxu0
        %v968 = vadd.f32 %v898, %v967
        %v969 = vpop.f32.mrb[0].mxu0
        %v970 = vadd.f32 %v901, %v969
        %v971 = vpop.f32.mrb[0].mxu0
        %v972 = vadd.f32 %v902, %v971
        %973 = vdwg.mxu0
        %974 = vmatprep.subr.bf16.mxu0 %v883
        %975 = vmatpush1.bf16.msra.mxu0 %v882
        %976 = vmatprep.subr.bf16.mxu0 %v887
        %977 = vmatpush1.bf16.msra.mxu0 %v886
        %978 = vmatprep.subr.bf16.mxu0 0
        %979 = vmatpush1.bf16.msra.mxu0 0
        %980 = vmatprep.subr.bf16.mxu0 0
        %981 = vmatpush1.bf16.msra.mxu0 0
        %982 = vmatprep.subr.bf16.mxu0 0
        %983 = vmatpush1.bf16.msra.mxu0 0
        %984 = vmatprep.subr.bf16.mxu0 0
        %985 = vmatpush1.bf16.msra.mxu0 0
        %986 = vmatprep.subr.bf16.mxu0 0
        %987 = vmatpush1.bf16.msra.mxu0 0
        %988 = vmatprep.subr.bf16.mxu0 0
        %989 = vmatpush1.bf16.msra.mxu0 0
        %990 = vmatprep.subr.bf16.mxu0 0
        %991 = vmatpush1.bf16.msra.mxu0 0
        %992 = vmatprep.subr.bf16.mxu0 0
        %993 = vmatpush1.bf16.msra.mxu0 0
        %994 = vmatprep.subr.bf16.mxu0 0
        %995 = vmatpush1.bf16.msra.mxu0 0
        %996 = vmatprep.subr.bf16.mxu0 0
        %997 = vmatpush1.bf16.msra.mxu0 0
        %998 = vmatprep.subr.bf16.mxu0 0
        %999 = vmatpush1.bf16.msra.mxu0 0
        %1000 = vmatprep.subr.bf16.mxu0 0
        %1001 = vmatpush1.bf16.msra.mxu0 0
        %1002 = vmatprep.subr.bf16.mxu0 0
        %1003 = vmatpush1.bf16.msra.mxu0 0
        %1004 = vmatprep.subr.bf16.mxu0 0
        %1005 = vmatpush1.bf16.msra.mxu0 0
        %1006 = vmatprep.mubr.bf16.mxu0 0
        %1007 = vmatmul.mubr.bf16.gmra.mrb[0].mxu0 %v916
        %v1008 = vpop.f32.mrb[0].mxu0
        %v1009 = vadd.f32 %v891, %v1008
        %v1010 = vpop.f32.mrb[0].mxu0
        %v1011 = vadd.f32 %v892, %v1010
        %v1012 = vpop.f32.mrb[0].mxu0
        %v1013 = vadd.f32 %v895, %v1012
        %v1014 = vpop.f32.mrb[0].mxu0
        %v1015 = vadd.f32 %v896, %v1014
        %1016 = vmatprep.mubr.bf16.mxu0 0
        %1017 = vmatmul.mubr.bf16.gmra.mrb[0].mxu0 %v919
        %v1018 = vpop.f32.mrb[0].mxu0
        %v1019 = vadd.f32 %v899, %v1018
        %v1020 = vpop.f32.mrb[0].mxu0
        %v1021 = vadd.f32 %v900, %v1020
        %v1022 = vpop.f32.mrb[0].mxu0
        %v1023 = vadd.f32 %v903, %v1022
        %v1024 = vpop.f32.mrb[0].mxu0
        %v1025 = vadd.f32 %v904, %v1024
        %1026 = vdwg.mxu0
        %v1027 = vtanh.pop %v956
        %v1028 = vtanh.pop %v958
        %v1029 = vtanh.pop %v1009
        %v1030 = vtanh.pop %v1011
        %v1031 = vtanh.pop %v960
        %v1032 = vtanh.pop %v962
        %v1033 = vtanh.pop %v1013
        %v1034 = vtanh.pop %v1015
        %v1035 = vtanh.pop %v966
        %v1036 = vtanh.pop %v968
        %v1037 = vtanh.pop %v1019
        %v1038 = vtanh.pop %v1021
        %v1039 = vtanh.pop %v970
        %v1040 = vtanh.pop %v972
        %v1041 = vtanh.pop %v1023
        %v1042 = vtanh.pop %v1025
        %s1043 = scalar_lea.vmem [#allocation7], 48
        %v1044 = vld [vmem:[%s1043] sm:$0xf]
        %v1045 = vld [vmem:[%s1043 + $0x4] sm:$0xf]
        %v1046 = vld [vmem:[%s1043 + $0x8] sm:$0xf]
        %v1047 = vld [vmem:[%s1043 + $0xc] sm:$0xf]
        %v1048 = vpack.c.bf16 %v1031, %v1027
        %v1049 = vpack.c.bf16 %v1032, %v1028
        %v1050 = vpack.c.bf16 %v1033, %v1029
        %v1051 = vpack.c.bf16 %v1034, %v1030
        %v1052 = vpack.c.bf16 %v1039, %v1035
        %v1053 = vpack.c.bf16 %v1040, %v1036
        %v1054 = vpack.c.bf16 %v1041, %v1037
        %v1055 = vpack.c.bf16 %v1042, %v1038
        %s1056 = scalar_lea.vmem [#allocation8], 384
        %v1057 = vld [vmem:[%s1056] sm:$0xff]
        %v1058 = vld [vmem:[%s1056 + $0x8] sm:$0xff]
        %v1059 = vld [vmem:[%s1056 + $0x10] sm:$0xff]
        %v1060 = vld [vmem:[%s1056 + $0x18] sm:$0xff]
        %v1061 = vld [vmem:[%s1056 + $0x20] sm:$0xff]
        %v1062 = vld [vmem:[%s1056 + $0x28] sm:$0xff]
        %v1063 = vld [vmem:[%s1056 + $0x30] sm:$0xff]
        %v1064 = vld [vmem:[%s1056 + $0x38] sm:$0xff]
        %v1065 = vld [vmem:[%s1056 + $0x40] sm:$0xff]
        %v1066 = vld [vmem:[%s1056 + $0x48] sm:$0xff]
        %v1067 = vld [vmem:[%s1056 + $0x50] sm:$0xff]
        %v1068 = vld [vmem:[%s1056 + $0x58] sm:$0xff]
        %v1069 = vld [vmem:[%s1056 + $0x60] sm:$0xff]
        %v1070 = vld [vmem:[%s1056 + $0x68] sm:$0xff]
        %v1071 = vld [vmem:[%s1056 + $0x70] sm:$0xff]
        %v1072 = vld [vmem:[%s1056 + $0x78] sm:$0xff]
        %v1077 = vunpack.c.l.b16 %v1044
        %v1078 = vunpack.c.l.b16 %v1045
        %v1079 = vunpack.c.l.b16 %v1046
        %v1080 = vunpack.c.l.b16 %v1047
        %v1081 = vpack.c.b16 %v1078, %v1077
        %v1082 = vpack.c.b16 %v1080, %v1079
        %v1084 = vsel %vm578, %v1081, 0
        %v1087 = vsel %vm578, %v1082, 0
        %1089 = vmatprep.subr.bf16.mxu0 %v1049
        %1090 = vmatpush1.bf16.msra.mxu0 %v1048
        %1091 = vmatprep.subr.bf16.mxu0 %v1053
        %1092 = vmatpush1.bf16.msra.mxu0 %v1052
        %1093 = vmatprep.subr.bf16.mxu0 0
        %1094 = vmatpush1.bf16.msra.mxu0 0
        %1095 = vmatprep.subr.bf16.mxu0 0
        %1096 = vmatpush1.bf16.msra.mxu0 0
        %1097 = vmatprep.subr.bf16.mxu0 0
        %1098 = vmatpush1.bf16.msra.mxu0 0
        %1099 = vmatprep.subr.bf16.mxu0 0
        %1100 = vmatpush1.bf16.msra.mxu0 0
        %1101 = vmatprep.subr.bf16.mxu0 0
        %1102 = vmatpush1.bf16.msra.mxu0 0
        %1103 = vmatprep.subr.bf16.mxu0 0
        %1104 = vmatpush1.bf16.msra.mxu0 0
        %1105 = vmatprep.subr.bf16.mxu0 0
        %1106 = vmatpush1.bf16.msra.mxu0 0
        %1107 = vmatprep.subr.bf16.mxu0 0
        %1108 = vmatpush1.bf16.msra.mxu0 0
        %1109 = vmatprep.subr.bf16.mxu0 0
        %1110 = vmatpush1.bf16.msra.mxu0 0
        %1111 = vmatprep.subr.bf16.mxu0 0
        %1112 = vmatpush1.bf16.msra.mxu0 0
        %1113 = vmatprep.subr.bf16.mxu0 0
        %1114 = vmatpush1.bf16.msra.mxu0 0
        %1115 = vmatprep.subr.bf16.mxu0 0
        %1116 = vmatpush1.bf16.msra.mxu0 0
        %1117 = vmatprep.subr.bf16.mxu0 0
        %1118 = vmatpush1.bf16.msra.mxu0 0
        %1119 = vmatprep.subr.bf16.mxu0 0
        %1120 = vmatpush1.bf16.msra.mxu0 0
        %1121 = vmatprep.mubr.bf16.mxu0 0
        %1122 = vmatmul.mubr.bf16.gmra.mrb[0].mxu0 %v1084
        %v1123 = vpop.f32.mrb[0].mxu0
        %v1124 = vadd.f32 %v1057, %v1123
        %v1125 = vpop.f32.mrb[0].mxu0
        %v1126 = vadd.f32 %v1058, %v1125
        %v1127 = vpop.f32.mrb[0].mxu0
        %v1128 = vadd.f32 %v1061, %v1127
        %v1129 = vpop.f32.mrb[0].mxu0
        %v1130 = vadd.f32 %v1062, %v1129
        %1131 = vmatprep.mubr.bf16.mxu0 0
        %1132 = vmatmul.mubr.bf16.gmra.mrb[0].mxu0 %v1087
        %v1133 = vpop.f32.mrb[0].mxu0
        %v1134 = vadd.f32 %v1065, %v1133
        %v1135 = vpop.f32.mrb[0].mxu0
        %v1136 = vadd.f32 %v1066, %v1135
        %v1137 = vpop.f32.mrb[0].mxu0
        %v1138 = vadd.f32 %v1069, %v1137
        %v1139 = vpop.f32.mrb[0].mxu0
        %v1140 = vadd.f32 %v1070, %v1139
        %1141 = vdwg.mxu0
        %1142 = vmatprep.subr.bf16.mxu0 %v1051
        %1143 = vmatpush1.bf16.msra.mxu0 %v1050
        %1144 = vmatprep.subr.bf16.mxu0 %v1055
        %1145 = vmatpush1.bf16.msra.mxu0 %v1054
        %1146 = vmatprep.subr.bf16.mxu0 0
        %1147 = vmatpush1.bf16.msra.mxu0 0
        %1148 = vmatprep.subr.bf16.mxu0 0
        %1149 = vmatpush1.bf16.msra.mxu0 0
        %1150 = vmatprep.subr.bf16.mxu0 0
        %1151 = vmatpush1.bf16.msra.mxu0 0
        %1152 = vmatprep.subr.bf16.mxu0 0
        %1153 = vmatpush1.bf16.msra.mxu0 0
        %1154 = vmatprep.subr.bf16.mxu0 0
        %1155 = vmatpush1.bf16.msra.mxu0 0
        %1156 = vmatprep.subr.bf16.mxu0 0
        %1157 = vmatpush1.bf16.msra.mxu0 0
        %1158 = vmatprep.subr.bf16.mxu0 0
        %1159 = vmatpush1.bf16.msra.mxu0 0
        %1160 = vmatprep.subr.bf16.mxu0 0
        %1161 = vmatpush1.bf16.msra.mxu0 0
        %1162 = vmatprep.subr.bf16.mxu0 0
        %1163 = vmatpush1.bf16.msra.mxu0 0
        %1164 = vmatprep.subr.bf16.mxu0 0
        %1165 = vmatpush1.bf16.msra.mxu0 0
        %1166 = vmatprep.subr.bf16.mxu0 0
        %1167 = vmatpush1.bf16.msra.mxu0 0
        %1168 = vmatprep.subr.bf16.mxu0 0
        %1169 = vmatpush1.bf16.msra.mxu0 0
        %1170 = vmatprep.subr.bf16.mxu0 0
        %1171 = vmatpush1.bf16.msra.mxu0 0
        %1172 = vmatprep.subr.bf16.mxu0 0
        %1173 = vmatpush1.bf16.msra.mxu0 0
        %1174 = vmatprep.mubr.bf16.mxu0 0
        %1175 = vmatmul.mubr.bf16.gmra.mrb[0].mxu0 %v1084
        %v1176 = vpop.f32.mrb[0].mxu0
        %v1177 = vadd.f32 %v1059, %v1176
        %v1178 = vpop.f32.mrb[0].mxu0
        %v1179 = vadd.f32 %v1060, %v1178
        %v1180 = vpop.f32.mrb[0].mxu0
        %v1181 = vadd.f32 %v1063, %v1180
        %v1182 = vpop.f32.mrb[0].mxu0
        %v1183 = vadd.f32 %v1064, %v1182
        %1184 = vmatprep.mubr.bf16.mxu0 0
        %1185 = vmatmul.mubr.bf16.gmra.mrb[0].mxu0 %v1087
        %v1186 = vpop.f32.mrb[0].mxu0
        %v1187 = vadd.f32 %v1067, %v1186
        %v1188 = vpop.f32.mrb[0].mxu0
        %v1189 = vadd.f32 %v1068, %v1188
        %v1190 = vpop.f32.mrb[0].mxu0
        %v1191 = vadd.f32 %v1071, %v1190
        %v1192 = vpop.f32.mrb[0].mxu0
        %v1193 = vadd.f32 %v1072, %v1192
        %1194 = vdwg.mxu0
        %v1195 = vtanh.pop %v1124
        %v1196 = vtanh.pop %v1126
        %v1197 = vtanh.pop %v1177
        %v1198 = vtanh.pop %v1179
        %v1199 = vtanh.pop %v1128
        %v1200 = vtanh.pop %v1130
        %v1201 = vtanh.pop %v1181
        %v1202 = vtanh.pop %v1183
        %v1203 = vtanh.pop %v1134
        %v1204 = vtanh.pop %v1136
        %v1205 = vtanh.pop %v1187
        %v1206 = vtanh.pop %v1189
        %v1207 = vtanh.pop %v1138
        %v1208 = vtanh.pop %v1140
        %v1209 = vtanh.pop %v1191
        %v1210 = vtanh.pop %v1193
        %s1211 = scalar_lea.vmem [#allocation7], 64
        %v1212 = vld [vmem:[%s1211] sm:$0xf]
        %v1213 = vld [vmem:[%s1211 + $0x4] sm:$0xf]
        %v1214 = vld [vmem:[%s1211 + $0x8] sm:$0xf]
        %v1215 = vld [vmem:[%s1211 + $0xc] sm:$0xf]
        %v1216 = vpack.c.bf16 %v1199, %v1195
        %v1217 = vpack.c.bf16 %v1200, %v1196
        %v1218 = vpack.c.bf16 %v1201, %v1197
        %v1219 = vpack.c.bf16 %v1202, %v1198
        %v1220 = vpack.c.bf16 %v1207, %v1203
        %v1221 = vpack.c.bf16 %v1208, %v1204
        %v1222 = vpack.c.bf16 %v1209, %v1205
        %v1223 = vpack.c.bf16 %v1210, %v1206
        %s1224 = scalar_lea.vmem [#allocation8], 512
        %v1225 = vld [vmem:[%s1224] sm:$0xff]
        %v1226 = vld [vmem:[%s1224 + $0x8] sm:$0xff]
        %v1227 = vld [vmem:[%s1224 + $0x10] sm:$0xff]
        %v1228 = vld [vmem:[%s1224 + $0x18] sm:$0xff]
        %v1229 = vld [vmem:[%s1224 + $0x20] sm:$0xff]
        %v1230 = vld [vmem:[%s1224 + $0x28] sm:$0xff]
        %v1231 = vld [vmem:[%s1224 + $0x30] sm:$0xff]
        %v1232 = vld [vmem:[%s1224 + $0x38] sm:$0xff]
        %v1233 = vld [vmem:[%s1224 + $0x40] sm:$0xff]
        %v1234 = vld [vmem:[%s1224 + $0x48] sm:$0xff]
        %v1235 = vld [vmem:[%s1224 + $0x50] sm:$0xff]
        %v1236 = vld [vmem:[%s1224 + $0x58] sm:$0xff]
        %v1237 = vld [vmem:[%s1224 + $0x60] sm:$0xff]
        %v1238 = vld [vmem:[%s1224 + $0x68] sm:$0xff]
        %v1239 = vld [vmem:[%s1224 + $0x70] sm:$0xff]
        %v1240 = vld [vmem:[%s1224 + $0x78] sm:$0xff]
        %v1245 = vunpack.c.l.b16 %v1212
        %v1246 = vunpack.c.l.b16 %v1213
        %v1247 = vunpack.c.l.b16 %v1214
        %v1248 = vunpack.c.l.b16 %v1215
        %v1249 = vpack.c.b16 %v1246, %v1245
        %v1250 = vpack.c.b16 %v1248, %v1247
        %v1252 = vsel %vm578, %v1249, 0
        %v1255 = vsel %vm578, %v1250, 0
        %1257 = vmatprep.subr.bf16.mxu0 %v1217
        %1258 = vmatpush1.bf16.msra.mxu0 %v1216
        %1259 = vmatprep.subr.bf16.mxu0 %v1221
        %1260 = vmatpush1.bf16.msra.mxu0 %v1220
        %1261 = vmatprep.subr.bf16.mxu0 0
        %1262 = vmatpush1.bf16.msra.mxu0 0
        %1263 = vmatprep.subr.bf16.mxu0 0
        %1264 = vmatpush1.bf16.msra.mxu0 0
        %1265 = vmatprep.subr.bf16.mxu0 0
        %1266 = vmatpush1.bf16.msra.mxu0 0
        %1267 = vmatprep.subr.bf16.mxu0 0
        %1268 = vmatpush1.bf16.msra.mxu0 0
        %1269 = vmatprep.subr.bf16.mxu0 0
        %1270 = vmatpush1.bf16.msra.mxu0 0
        %1271 = vmatprep.subr.bf16.mxu0 0
        %1272 = vmatpush1.bf16.msra.mxu0 0
        %1273 = vmatprep.subr.bf16.mxu0 0
        %1274 = vmatpush1.bf16.msra.mxu0 0
        %1275 = vmatprep.subr.bf16.mxu0 0
        %1276 = vmatpush1.bf16.msra.mxu0 0
        %1277 = vmatprep.subr.bf16.mxu0 0
        %1278 = vmatpush1.bf16.msra.mxu0 0
        %1279 = vmatprep.subr.bf16.mxu0 0
        %1280 = vmatpush1.bf16.msra.mxu0 0
        %1281 = vmatprep.subr.bf16.mxu0 0
        %1282 = vmatpush1.bf16.msra.mxu0 0
        %1283 = vmatprep.subr.bf16.mxu0 0
        %1284 = vmatpush1.bf16.msra.mxu0 0
        %1285 = vmatprep.subr.bf16.mxu0 0
        %1286 = vmatpush1.bf16.msra.mxu0 0
        %1287 = vmatprep.subr.bf16.mxu0 0
        %1288 = vmatpush1.bf16.msra.mxu0 0
        %1289 = vmatprep.mubr.bf16.mxu0 0
        %1290 = vmatmul.mubr.bf16.gmra.mrb[0].mxu0 %v1252
        %v1291 = vpop.f32.mrb[0].mxu0
        %v1292 = vadd.f32 %v1225, %v1291
        %v1293 = vpop.f32.mrb[0].mxu0
        %v1294 = vadd.f32 %v1226, %v1293
        %v1295 = vpop.f32.mrb[0].mxu0
        %v1296 = vadd.f32 %v1229, %v1295
        %v1297 = vpop.f32.mrb[0].mxu0
        %v1298 = vadd.f32 %v1230, %v1297
        %1299 = vmatprep.mubr.bf16.mxu0 0
        %1300 = vmatmul.mubr.bf16.gmra.mrb[0].mxu0 %v1255
        %v1301 = vpop.f32.mrb[0].mxu0
        %v1302 = vadd.f32 %v1233, %v1301
        %v1303 = vpop.f32.mrb[0].mxu0
        %v1304 = vadd.f32 %v1234, %v1303
        %v1305 = vpop.f32.mrb[0].mxu0
        %v1306 = vadd.f32 %v1237, %v1305
        %v1307 = vpop.f32.mrb[0].mxu0
        %v1308 = vadd.f32 %v1238, %v1307
        %1309 = vdwg.mxu0
        %1310 = vmatprep.subr.bf16.mxu0 %v1219
        %1311 = vmatpush1.bf16.msra.mxu0 %v1218
        %1312 = vmatprep.subr.bf16.mxu0 %v1223
        %1313 = vmatpush1.bf16.msra.mxu0 %v1222
        %1314 = vmatprep.subr.bf16.mxu0 0
        %1315 = vmatpush1.bf16.msra.mxu0 0
        %1316 = vmatprep.subr.bf16.mxu0 0
        %1317 = vmatpush1.bf16.msra.mxu0 0
        %1318 = vmatprep.subr.bf16.mxu0 0
        %1319 = vmatpush1.bf16.msra.mxu0 0
        %1320 = vmatprep.subr.bf16.mxu0 0
        %1321 = vmatpush1.bf16.msra.mxu0 0
        %1322 = vmatprep.subr.bf16.mxu0 0
        %1323 = vmatpush1.bf16.msra.mxu0 0
        %1324 = vmatprep.subr.bf16.mxu0 0
        %1325 = vmatpush1.bf16.msra.mxu0 0
        %1326 = vmatprep.subr.bf16.mxu0 0
        %1327 = vmatpush1.bf16.msra.mxu0 0
        %1328 = vmatprep.subr.bf16.mxu0 0
        %1329 = vmatpush1.bf16.msra.mxu0 0
        %1330 = vmatprep.subr.bf16.mxu0 0
        %1331 = vmatpush1.bf16.msra.mxu0 0
        %1332 = vmatprep.subr.bf16.mxu0 0
        %1333 = vmatpush1.bf16.msra.mxu0 0
        %1334 = vmatprep.subr.bf16.mxu0 0
        %1335 = vmatpush1.bf16.msra.mxu0 0
        %1336 = vmatprep.subr.bf16.mxu0 0
        %1337 = vmatpush1.bf16.msra.mxu0 0
        %1338 = vmatprep.subr.bf16.mxu0 0
        %1339 = vmatpush1.bf16.msra.mxu0 0
        %1340 = vmatprep.subr.bf16.mxu0 0
        %1341 = vmatpush1.bf16.msra.mxu0 0
        %1342 = vmatprep.mubr.bf16.mxu0 0
        %1343 = vmatmul.mubr.bf16.gmra.mrb[0].mxu0 %v1252
        %v1344 = vpop.f32.mrb[0].mxu0
        %v1345 = vadd.f32 %v1227, %v1344
        %v1346 = vpop.f32.mrb[0].mxu0
        %v1347 = vadd.f32 %v1228, %v1346
        %v1348 = vpop.f32.mrb[0].mxu0
        %v1349 = vadd.f32 %v1231, %v1348
        %v1350 = vpop.f32.mrb[0].mxu0
        %v1351 = vadd.f32 %v1232, %v1350
        %1352 = vmatprep.mubr.bf16.mxu0 0
        %1353 = vmatmul.mubr.bf16.gmra.mrb[0].mxu0 %v1255
        %v1354 = vpop.f32.mrb[0].mxu0
        %v1355 = vadd.f32 %v1235, %v1354
        %v1356 = vpop.f32.mrb[0].mxu0
        %v1357 = vadd.f32 %v1236, %v1356
        %v1358 = vpop.f32.mrb[0].mxu0
        %v1359 = vadd.f32 %v1239, %v1358
        %v1360 = vpop.f32.mrb[0].mxu0
        %v1361 = vadd.f32 %v1240, %v1360
        %1362 = vdwg.mxu0
        %v1363 = vtanh.pop %v1292
        %v1364 = vtanh.pop %v1294
        %v1365 = vtanh.pop %v1345
        %v1366 = vtanh.pop %v1347
        %v1367 = vtanh.pop %v1296
        %v1368 = vtanh.pop %v1298
        %v1369 = vtanh.pop %v1349
        %v1370 = vtanh.pop %v1351
        %v1371 = vtanh.pop %v1302
        %v1372 = vtanh.pop %v1304
        %v1373 = vtanh.pop %v1355
        %v1374 = vtanh.pop %v1357
        %v1375 = vtanh.pop %v1306
        %v1376 = vtanh.pop %v1308
        %v1377 = vtanh.pop %v1359
        %v1378 = vtanh.pop %v1361
        %v1379 = vld [vmem:[%s5] sm:$0x1]
        %v1380 = vpack.c.bf16 %v1367, %v1363
        %v1381 = vpack.c.bf16 %v1368, %v1364
        %v1382 = vpack.c.bf16 %v1369, %v1365
        %v1383 = vpack.c.bf16 %v1370, %v1366
        %v1384 = vpack.c.bf16 %v1375, %v1371
        %v1385 = vpack.c.bf16 %v1376, %v1372
        %v1386 = vpack.c.bf16 %v1377, %v1373
        %v1387 = vpack.c.bf16 %v1378, %v1374
        %v1388 = vld [vmem:[%s6] sm:$0xf]
        %v1390 = vlaneseq
        %v1391 = vshrl.u32 %v1390, 7
        %v1392 = vsub.s32 0, %v1391
        %v1393 = vrot.slane %v1388, %v1392
        %v1394 = vlaneseq
        %v1395 = vshrl.u32 %v1394, 7
        %v1396 = vsub.s32 1, %v1395
        %v1397 = vrot.slane %v1388, %v1396
        %v1398 = vlaneseq
        %v1399 = vshrl.u32 %v1398, 7
        %v1400 = vsub.s32 2, %v1399
        %v1401 = vrot.slane %v1388, %v1400
        %v1402 = vlaneseq
        %v1403 = vshrl.u32 %v1402, 7
        %v1404 = vsub.s32 3, %v1403
        %v1405 = vrot.slane %v1388, %v1404
        %v1411 = vsel %vm578, %v1379, 0
        %1413 = vmatprep.subr.bf16.mxu0 %v1381
        %1414 = vmatpush1.bf16.msra.mxu0 %v1380
        %1415 = vmatprep.subr.bf16.mxu0 %v1385
        %1416 = vmatpush1.bf16.msra.mxu0 %v1384
        %1417 = vmatprep.subr.bf16.mxu0 0
        %1418 = vmatpush1.bf16.msra.mxu0 0
        %1419 = vmatprep.subr.bf16.mxu0 0
        %1420 = vmatpush1.bf16.msra.mxu0 0
        %1421 = vmatprep.subr.bf16.mxu0 0
        %1422 = vmatpush1.bf16.msra.mxu0 0
        %1423 = vmatprep.subr.bf16.mxu0 0
        %1424 = vmatpush1.bf16.msra.mxu0 0
        %1425 = vmatprep.subr.bf16.mxu0 0
        %1426 = vmatpush1.bf16.msra.mxu0 0
        %1427 = vmatprep.subr.bf16.mxu0 0
        %1428 = vmatpush1.bf16.msra.mxu0 0
        %1429 = vmatprep.subr.bf16.mxu0 0
        %1430 = vmatpush1.bf16.msra.mxu0 0
        %1431 = vmatprep.subr.bf16.mxu0 0
        %1432 = vmatpush1.bf16.msra.mxu0 0
        %1433 = vmatprep.subr.bf16.mxu0 0
        %1434 = vmatpush1.bf16.msra.mxu0 0
        %1435 = vmatprep.subr.bf16.mxu0 0
        %1436 = vmatpush1.bf16.msra.mxu0 0
        %1437 = vmatprep.subr.bf16.mxu0 0
        %1438 = vmatpush1.bf16.msra.mxu0 0
        %1439 = vmatprep.subr.bf16.mxu0 0
        %1440 = vmatpush1.bf16.msra.mxu0 0
        %1441 = vmatprep.subr.bf16.mxu0 0
        %1442 = vmatpush1.bf16.msra.mxu0 0
        %1443 = vmatprep.subr.bf16.mxu0 0
        %1444 = vmatpush1.bf16.msra.mxu0 0
        %1445 = vmatprep.mubr.bf16.mxu0 0
        %1446 = vmatmul.mubr.bf16.gmra.mrb[0].mxu0 %v1411
        %v1447 = vpop.f32.mrb[0].mxu0
        %v1448 = vadd.f32 %v1393, %v1447
        %v1449 = vpop.f32.mrb[0].mxu0
        %v1450 = vadd.f32 %v1397, %v1449
        %v1451 = vpop.f32.mrb[0].mxu0
        %v1452 = vpop.f32.mrb[0].mxu0
        %1453 = vdwg.mxu0
        %1454 = vmatprep.subr.bf16.mxu0 %v1383
        %1455 = vmatpush1.bf16.msra.mxu0 %v1382
        %1456 = vmatprep.subr.bf16.mxu0 %v1387
        %1457 = vmatpush1.bf16.msra.mxu0 %v1386
        %1458 = vmatprep.subr.bf16.mxu0 0
        %1459 = vmatpush1.bf16.msra.mxu0 0
        %1460 = vmatprep.subr.bf16.mxu0 0
        %1461 = vmatpush1.bf16.msra.mxu0 0
        %1462 = vmatprep.subr.bf16.mxu0 0
        %1463 = vmatpush1.bf16.msra.mxu0 0
        %1464 = vmatprep.subr.bf16.mxu0 0
        %1465 = vmatpush1.bf16.msra.mxu0 0
        %1466 = vmatprep.subr.bf16.mxu0 0
        %1467 = vmatpush1.bf16.msra.mxu0 0
        %1468 = vmatprep.subr.bf16.mxu0 0
        %1469 = vmatpush1.bf16.msra.mxu0 0
        %1470 = vmatprep.subr.bf16.mxu0 0
        %1471 = vmatpush1.bf16.msra.mxu0 0
        %1472 = vmatprep.subr.bf16.mxu0 0
        %1473 = vmatpush1.bf16.msra.mxu0 0
        %1474 = vmatprep.subr.bf16.mxu0 0
        %1475 = vmatpush1.bf16.msra.mxu0 0
        %1476 = vmatprep.subr.bf16.mxu0 0
        %1477 = vmatpush1.bf16.msra.mxu0 0
        %1478 = vmatprep.subr.bf16.mxu0 0
        %1479 = vmatpush1.bf16.msra.mxu0 0
        %1480 = vmatprep.subr.bf16.mxu0 0
        %1481 = vmatpush1.bf16.msra.mxu0 0
        %1482 = vmatprep.subr.bf16.mxu0 0
        %1483 = vmatpush1.bf16.msra.mxu0 0
        %1484 = vmatprep.subr.bf16.mxu0 0
        %1485 = vmatpush1.bf16.msra.mxu0 0
        %1486 = vmatprep.mubr.bf16.mxu0 0
        %1487 = vmatmul.mubr.bf16.gmra.mrb[0].mxu0 %v1411
        %v1488 = vpop.f32.mrb[0].mxu0
        %v1489 = vadd.f32 %v1401, %v1488
        %v1490 = vpop.f32.mrb[0].mxu0
        %v1491 = vadd.f32 %v1405, %v1490
        %v1492 = vpop.f32.mrb[0].mxu0
        %v1493 = vpop.f32.mrb[0].mxu0
        %1494 = vdwg.mxu0
        %v1499 = vcombine.low %v1448, %v1450
        %v1500 = vcombine.low %v1489, %v1491
        %v1502 = vunpack.c.l.s4 1966171168
        %v1503 = vunpack.c.0.s8 %v1502
        %v1504 = vlaneseq
        %v1505 = vshrl.u32 %v1504, 7
        %v1506 = vsub.s32 %v1503, %v1505
        %v1507 = vrot.slane %v1499, %v1506
        %v1509 = vunpack.c.l.s4 1966171168
        %v1510 = vunpack.c.0.s8 %v1509
        %v1511 = vlaneseq
        %v1512 = vshrl.u32 %v1511, 7
        %v1513 = vsub.s32 %v1510, %v1512
        %v1514 = vrot.slane %v1500, %v1513
        %v1515 = vcombine.low %v1507, %v1514
        %v1517 = vunpack.c.l.s4 1966171168
        %v1518 = vunpack.c.0.s8 %v1517
        %v1519 = vlaneseq
        %v1520 = vshrl.u32 %v1519, 7
        %v1521 = vsub.s32 %v1518, %v1520
        %v1522 = vrot.slane %v1515, %v1521
        %v1524 = vlaneseq
        %vm1525 = vcmp.ge.s32.totalorder %v1524, 0
        %vm1526 = vcmp.lt.s32.totalorder %v1524, 512
        %vm1527 = vmand %vm1525, %vm1526
        %1528 = vst.msk [vmem:[%s338] sm:$0xf] %vm1527, %v1522
        %v1529 = vld [vmem:[%s1] sm:$0xf]
        %v1530 = vld [vmem:[%s1 + $0x4] sm:$0xf]
        %v1531 = vld [vmem:[%s1 + $0x8] sm:$0xf]
        %v1532 = vld [vmem:[%s1 + $0xc] sm:$0xf]
        %v1533 = vld [vmem:[%s296 + $0x4] sm:$0xf]
        %v1534 = vld [vmem:[#allocation5] sm:$0xff]
        %v1535 = vld [vmem:[#allocation5 + $0x8] sm:$0xff]
        %v1536 = vld [vmem:[#allocation5 + $0x10] sm:$0xff]
        %v1537 = vld [vmem:[#allocation5 + $0x18] sm:$0xff]
        %v1538 = vld [vmem:[#allocation5 + $0x20] sm:$0xff]
        %v1539 = vld [vmem:[#allocation5 + $0x28] sm:$0xff]
        %v1540 = vld [vmem:[#allocation5 + $0x30] sm:$0xff]
        %v1541 = vld [vmem:[#allocation5 + $0x38] sm:$0xff]
        %v1542 = vld [vmem:[#allocation5 + $0x40] sm:$0xff]
        %v1543 = vld [vmem:[#allocation5 + $0x48] sm:$0xff]
        %v1544 = vld [vmem:[#allocation5 + $0x50] sm:$0xff]
        %v1545 = vld [vmem:[#allocation5 + $0x58] sm:$0xff]
        %v1546 = vld [vmem:[#allocation5 + $0x60] sm:$0xff]
        %v1547 = vld [vmem:[#allocation5 + $0x68] sm:$0xff]
        %v1548 = vld [vmem:[#allocation5 + $0x70] sm:$0xff]
        %v1549 = vld [vmem:[#allocation5 + $0x78] sm:$0xff]
        %v1554 = vunpack.c.l.b16 %v1529
        %v1555 = vunpack.c.l.b16 %v1530
        %v1556 = vunpack.c.l.b16 %v1531
        %v1557 = vunpack.c.l.b16 %v1532
        %v1558 = vpack.c.b16 %v1555, %v1554
        %v1559 = vpack.c.b16 %v1557, %v1556
        %v1562 = vunpack.c.l.s4 1966171168
        %v1563 = vunpack.c.0.s8 %v1562
        %v1564 = vlaneseq
        %v1565 = vshrl.u32 %v1564, 7
        %v1566 = vsub.s32 %v1563, %v1565
        %v1567 = vrot.slane %v1533, %v1566
        %v1568 = vcombine.high %v1567, %v1567
        %v1570 = vunpack.c.l.s4 1966171168
        %v1571 = vunpack.c.0.s8 %v1570
        %v1572 = vlaneseq
        %v1573 = vshrl.u32 %v1572, 7
        %v1574 = vsub.s32 %v1571, %v1573
        %v1575 = vrot.slane %v1567, %v1574
        %v1577 = vunpack.c.l.s4 1966171168
        %v1578 = vunpack.c.0.s8 %v1577
        %v1579 = vlaneseq
        %v1580 = vshrl.u32 %v1579, 7
        %v1581 = vsub.s32 %v1578, %v1580
        %v1582 = vrot.slane %v1568, %v1581
        %v1583 = vcombine.high %v1575, %v1575
        %v1584 = vcombine.high %v1582, %v1582
        %v1586 = vsel %vm398, %v1558, 0
        %v1589 = vsel %vm398, %v1559, 0
        %v1592 = vsel %vm405, %v1575, 0
        %v1595 = vsel %vm405, %v1582, 0
        %v1598 = vsel %vm405, %v1583, 0
        %v1601 = vsel %vm405, %v1584, 0
        %1603 = vmatprep.subr.bf16.mxu0 %v1595
        %1604 = vmatpush1.bf16.msra.mxu0 %v1592
        %1605 = vmatprep.subr.bf16.mxu0 0
        %1606 = vmatpush1.bf16.msra.mxu0 0
        %1607 = vmatprep.subr.bf16.mxu0 0
        %1608 = vmatpush1.bf16.msra.mxu0 0
        %1609 = vmatprep.subr.bf16.mxu0 0
        %1610 = vmatpush1.bf16.msra.mxu0 0
        %1611 = vmatprep.subr.bf16.mxu0 0
        %1612 = vmatpush1.bf16.msra.mxu0 0
        %1613 = vmatprep.subr.bf16.mxu0 0
        %1614 = vmatpush1.bf16.msra.mxu0 0
        %1615 = vmatprep.subr.bf16.mxu0 0
        %1616 = vmatpush1.bf16.msra.mxu0 0
        %1617 = vmatprep.subr.bf16.mxu0 0
        %1618 = vmatpush1.bf16.msra.mxu0 0
        %1619 = vmatprep.subr.bf16.mxu0 0
        %1620 = vmatpush1.bf16.msra.mxu0 0
        %1621 = vmatprep.subr.bf16.mxu0 0
        %1622 = vmatpush1.bf16.msra.mxu0 0
        %1623 = vmatprep.subr.bf16.mxu0 0
        %1624 = vmatpush1.bf16.msra.mxu0 0
        %1625 = vmatprep.subr.bf16.mxu0 0
        %1626 = vmatpush1.bf16.msra.mxu0 0
        %1627 = vmatprep.subr.bf16.mxu0 0
        %1628 = vmatpush1.bf16.msra.mxu0 0
        %1629 = vmatprep.subr.bf16.mxu0 0
        %1630 = vmatpush1.bf16.msra.mxu0 0
        %1631 = vmatprep.subr.bf16.mxu0 0
        %1632 = vmatpush1.bf16.msra.mxu0 0
        %1633 = vmatprep.subr.bf16.mxu0 0
        %1634 = vmatpush1.bf16.msra.mxu0 0
        %1635 = vmatprep.mubr.bf16.mxu0 0
        %1636 = vmatmul.mubr.bf16.gmra.mrb[0].mxu0 %v1586
        %v1637 = vpop.f32.mrb[0].mxu0
        %v1638 = vadd.f32 %v1534, %v1637
        %v1639 = vpop.f32.mrb[0].mxu0
        %v1640 = vadd.f32 %v1535, %v1639
        %v1641 = vpop.f32.mrb[0].mxu0
        %v1642 = vadd.f32 %v1538, %v1641
        %v1643 = vpop.f32.mrb[0].mxu0
        %v1644 = vadd.f32 %v1539, %v1643
        %1645 = vmatprep.mubr.bf16.mxu0 0
        %1646 = vmatmul.mubr.bf16.gmra.mrb[0].mxu0 %v1589
        %v1647 = vpop.f32.mrb[0].mxu0
        %v1648 = vadd.f32 %v1542, %v1647
        %v1649 = vpop.f32.mrb[0].mxu0
        %v1650 = vadd.f32 %v1543, %v1649
        %v1651 = vpop.f32.mrb[0].mxu0
        %v1652 = vadd.f32 %v1546, %v1651
        %v1653 = vpop.f32.mrb[0].mxu0
        %v1654 = vadd.f32 %v1547, %v1653
        %1655 = vdwg.mxu0
        %1656 = vmatprep.subr.bf16.mxu0 %v1601
        %1657 = vmatpush1.bf16.msra.mxu0 %v1598
        %1658 = vmatprep.subr.bf16.mxu0 0
        %1659 = vmatpush1.bf16.msra.mxu0 0
        %1660 = vmatprep.subr.bf16.mxu0 0
        %1661 = vmatpush1.bf16.msra.mxu0 0
        %1662 = vmatprep.subr.bf16.mxu0 0
        %1663 = vmatpush1.bf16.msra.mxu0 0
        %1664 = vmatprep.subr.bf16.mxu0 0
        %1665 = vmatpush1.bf16.msra.mxu0 0
        %1666 = vmatprep.subr.bf16.mxu0 0
        %1667 = vmatpush1.bf16.msra.mxu0 0
        %1668 = vmatprep.subr.bf16.mxu0 0
        %1669 = vmatpush1.bf16.msra.mxu0 0
        %1670 = vmatprep.subr.bf16.mxu0 0
        %1671 = vmatpush1.bf16.msra.mxu0 0
        %1672 = vmatprep.subr.bf16.mxu0 0
        %1673 = vmatpush1.bf16.msra.mxu0 0
        %1674 = vmatprep.subr.bf16.mxu0 0
        %1675 = vmatpush1.bf16.msra.mxu0 0
        %1676 = vmatprep.subr.bf16.mxu0 0
        %1677 = vmatpush1.bf16.msra.mxu0 0
        %1678 = vmatprep.subr.bf16.mxu0 0
        %1679 = vmatpush1.bf16.msra.mxu0 0
        %1680 = vmatprep.subr.bf16.mxu0 0
        %1681 = vmatpush1.bf16.msra.mxu0 0
        %1682 = vmatprep.subr.bf16.mxu0 0
        %1683 = vmatpush1.bf16.msra.mxu0 0
        %1684 = vmatprep.subr.bf16.mxu0 0
        %1685 = vmatpush1.bf16.msra.mxu0 0
        %1686 = vmatprep.subr.bf16.mxu0 0
        %1687 = vmatpush1.bf16.msra.mxu0 0
        %1688 = vmatprep.mubr.bf16.mxu0 0
        %1689 = vmatmul.mubr.bf16.gmra.mrb[0].mxu0 %v1586
        %v1690 = vpop.f32.mrb[0].mxu0
        %v1691 = vadd.f32 %v1536, %v1690
        %v1692 = vpop.f32.mrb[0].mxu0
        %v1693 = vadd.f32 %v1537, %v1692
        %v1694 = vpop.f32.mrb[0].mxu0
        %v1695 = vadd.f32 %v1540, %v1694
        %v1696 = vpop.f32.mrb[0].mxu0
        %v1697 = vadd.f32 %v1541, %v1696
        %1698 = vmatprep.mubr.bf16.mxu0 0
        %1699 = vmatmul.mubr.bf16.gmra.mrb[0].mxu0 %v1589
        %v1700 = vpop.f32.mrb[0].mxu0
        %v1701 = vadd.f32 %v1544, %v1700
        %v1702 = vpop.f32.mrb[0].mxu0
        %v1703 = vadd.f32 %v1545, %v1702
        %v1704 = vpop.f32.mrb[0].mxu0
        %v1705 = vadd.f32 %v1548, %v1704
        %v1706 = vpop.f32.mrb[0].mxu0
        %v1707 = vadd.f32 %v1549, %v1706
        %1708 = vdwg.mxu0
        %v1709 = vtanh.pop %v1638
        %v1710 = vtanh.pop %v1640
        %v1711 = vtanh.pop %v1691
        %v1712 = vtanh.pop %v1693
        %v1713 = vtanh.pop %v1642
        %v1714 = vtanh.pop %v1644
        %v1715 = vtanh.pop %v1695
        %v1716 = vtanh.pop %v1697
        %v1717 = vtanh.pop %v1648
        %v1718 = vtanh.pop %v1650
        %v1719 = vtanh.pop %v1701
        %v1720 = vtanh.pop %v1703
        %v1721 = vtanh.pop %v1652
        %v1722 = vtanh.pop %v1654
        %v1723 = vtanh.pop %v1705
        %v1724 = vtanh.pop %v1707
        %v1725 = vld [vmem:[#allocation7] sm:$0xf]
        %v1726 = vld [vmem:[#allocation7 + $0x4] sm:$0xf]
        %v1727 = vld [vmem:[#allocation7 + $0x8] sm:$0xf]
        %v1728 = vld [vmem:[#allocation7 + $0xc] sm:$0xf]
        %v1729 = vpack.c.bf16 %v1713, %v1709
        %v1730 = vpack.c.bf16 %v1714, %v1710
        %v1731 = vpack.c.bf16 %v1715, %v1711
        %v1732 = vpack.c.bf16 %v1716, %v1712
        %v1733 = vpack.c.bf16 %v1721, %v1717
        %v1734 = vpack.c.bf16 %v1722, %v1718
        %v1735 = vpack.c.bf16 %v1723, %v1719
        %v1736 = vpack.c.bf16 %v1724, %v1720
        %v1737 = vld [vmem:[#allocation8] sm:$0xff]
        %v1738 = vld [vmem:[#allocation8 + $0x8] sm:$0xff]
        %v1739 = vld [vmem:[#allocation8 + $0x10] sm:$0xff]
        %v1740 = vld [vmem:[#allocation8 + $0x18] sm:$0xff]
        %v1741 = vld [vmem:[#allocation8 + $0x20] sm:$0xff]
        %v1742 = vld [vmem:[#allocation8 + $0x28] sm:$0xff]
        %v1743 = vld [vmem:[#allocation8 + $0x30] sm:$0xff]
        %v1744 = vld [vmem:[#allocation8 + $0x38] sm:$0xff]
        %v1745 = vld [vmem:[#allocation8 + $0x40] sm:$0xff]
        %v1746 = vld [vmem:[#allocation8 + $0x48] sm:$0xff]
        %v1747 = vld [vmem:[#allocation8 + $0x50] sm:$0xff]
        %v1748 = vld [vmem:[#allocation8 + $0x58] sm:$0xff]
        %v1749 = vld [vmem:[#allocation8 + $0x60] sm:$0xff]
        %v1750 = vld [vmem:[#allocation8 + $0x68] sm:$0xff]
        %v1751 = vld [vmem:[#allocation8 + $0x70] sm:$0xff]
        %v1752 = vld [vmem:[#allocation8 + $0x78] sm:$0xff]
        %v1757 = vunpack.c.l.b16 %v1725
        %v1758 = vunpack.c.l.b16 %v1726
        %v1759 = vunpack.c.l.b16 %v1727
        %v1760 = vunpack.c.l.b16 %v1728
        %v1761 = vpack.c.b16 %v1758, %v1757
        %v1762 = vpack.c.b16 %v1760, %v1759
        %v1764 = vsel %vm578, %v1761, 0
        %v1767 = vsel %vm578, %v1762, 0
        %1769 = vmatprep.subr.bf16.mxu0 %v1730
        %1770 = vmatpush1.bf16.msra.mxu0 %v1729
        %1771 = vmatprep.subr.bf16.mxu0 %v1734
        %1772 = vmatpush1.bf16.msra.mxu0 %v1733
        %1773 = vmatprep.subr.bf16.mxu0 0
        %1774 = vmatpush1.bf16.msra.mxu0 0
        %1775 = vmatprep.subr.bf16.mxu0 0
        %1776 = vmatpush1.bf16.msra.mxu0 0
        %1777 = vmatprep.subr.bf16.mxu0 0
        %1778 = vmatpush1.bf16.msra.mxu0 0
        %1779 = vmatprep.subr.bf16.mxu0 0
        %1780 = vmatpush1.bf16.msra.mxu0 0
        %1781 = vmatprep.subr.bf16.mxu0 0
        %1782 = vmatpush1.bf16.msra.mxu0 0
        %1783 = vmatprep.subr.bf16.mxu0 0
        %1784 = vmatpush1.bf16.msra.mxu0 0
        %1785 = vmatprep.subr.bf16.mxu0 0
        %1786 = vmatpush1.bf16.msra.mxu0 0
        %1787 = vmatprep.subr.bf16.mxu0 0
        %1788 = vmatpush1.bf16.msra.mxu0 0
        %1789 = vmatprep.subr.bf16.mxu0 0
        %1790 = vmatpush1.bf16.msra.mxu0 0
        %1791 = vmatprep.subr.bf16.mxu0 0
        %1792 = vmatpush1.bf16.msra.mxu0 0
        %1793 = vmatprep.subr.bf16.mxu0 0
        %1794 = vmatpush1.bf16.msra.mxu0 0
        %1795 = vmatprep.subr.bf16.mxu0 0
        %1796 = vmatpush1.bf16.msra.mxu0 0
        %1797 = vmatprep.subr.bf16.mxu0 0
        %1798 = vmatpush1.bf16.msra.mxu0 0
        %1799 = vmatprep.subr.bf16.mxu0 0
        %1800 = vmatpush1.bf16.msra.mxu0 0
        %1801 = vmatprep.mubr.bf16.mxu0 0
        %1802 = vmatmul.mubr.bf16.gmra.mrb[0].mxu0 %v1764
        %v1803 = vpop.f32.mrb[0].mxu0
        %v1804 = vadd.f32 %v1737, %v1803
        %v1805 = vpop.f32.mrb[0].mxu0
        %v1806 = vadd.f32 %v1738, %v1805
        %v1807 = vpop.f32.mrb[0].mxu0
        %v1808 = vadd.f32 %v1741, %v1807
        %v1809 = vpop.f32.mrb[0].mxu0
        %v1810 = vadd.f32 %v1742, %v1809
        %1811 = vmatprep.mubr.bf16.mxu0 0
        %1812 = vmatmul.mubr.bf16.gmra.mrb[0].mxu0 %v1767
        %v1813 = vpop.f32.mrb[0].mxu0
        %v1814 = vadd.f32 %v1745, %v1813
        %v1815 = vpop.f32.mrb[0].mxu0
        %v1816 = vadd.f32 %v1746, %v1815
        %v1817 = vpop.f32.mrb[0].mxu0
        %v1818 = vadd.f32 %v1749, %v1817
        %v1819 = vpop.f32.mrb[0].mxu0
        %v1820 = vadd.f32 %v1750, %v1819
        %1821 = vdwg.mxu0
        %1822 = vmatprep.subr.bf16.mxu0 %v1732
        %1823 = vmatpush1.bf16.msra.mxu0 %v1731
        %1824 = vmatprep.subr.bf16.mxu0 %v1736
        %1825 = vmatpush1.bf16.msra.mxu0 %v1735
        %1826 = vmatprep.subr.bf16.mxu0 0
        %1827 = vmatpush1.bf16.msra.mxu0 0
        %1828 = vmatprep.subr.bf16.mxu0 0
        %1829 = vmatpush1.bf16.msra.mxu0 0
        %1830 = vmatprep.subr.bf16.mxu0 0
        %1831 = vmatpush1.bf16.msra.mxu0 0
        %1832 = vmatprep.subr.bf16.mxu0 0
        %1833 = vmatpush1.bf16.msra.mxu0 0
        %1834 = vmatprep.subr.bf16.mxu0 0
        %1835 = vmatpush1.bf16.msra.mxu0 0
        %1836 = vmatprep.subr.bf16.mxu0 0
        %1837 = vmatpush1.bf16.msra.mxu0 0
        %1838 = vmatprep.subr.bf16.mxu0 0
        %1839 = vmatpush1.bf16.msra.mxu0 0
        %1840 = vmatprep.subr.bf16.mxu0 0
        %1841 = vmatpush1.bf16.msra.mxu0 0
        %1842 = vmatprep.subr.bf16.mxu0 0
        %1843 = vmatpush1.bf16.msra.mxu0 0
        %1844 = vmatprep.subr.bf16.mxu0 0
        %1845 = vmatpush1.bf16.msra.mxu0 0
        %1846 = vmatprep.subr.bf16.mxu0 0
        %1847 = vmatpush1.bf16.msra.mxu0 0
        %1848 = vmatprep.subr.bf16.mxu0 0
        %1849 = vmatpush1.bf16.msra.mxu0 0
        %1850 = vmatprep.subr.bf16.mxu0 0
        %1851 = vmatpush1.bf16.msra.mxu0 0
        %1852 = vmatprep.subr.bf16.mxu0 0
        %1853 = vmatpush1.bf16.msra.mxu0 0
        %1854 = vmatprep.mubr.bf16.mxu0 0
        %1855 = vmatmul.mubr.bf16.gmra.mrb[0].mxu0 %v1764
        %v1856 = vpop.f32.mrb[0].mxu0
        %v1857 = vadd.f32 %v1739, %v1856
        %v1858 = vpop.f32.mrb[0].mxu0
        %v1859 = vadd.f32 %v1740, %v1858
        %v1860 = vpop.f32.mrb[0].mxu0
        %v1861 = vadd.f32 %v1743, %v1860
        %v1862 = vpop.f32.mrb[0].mxu0
        %v1863 = vadd.f32 %v1744, %v1862
        %1864 = vmatprep.mubr.bf16.mxu0 0
        %1865 = vmatmul.mubr.bf16.gmra.mrb[0].mxu0 %v1767
        %v1866 = vpop.f32.mrb[0].mxu0
        %v1867 = vadd.f32 %v1747, %v1866
        %v1868 = vpop.f32.mrb[0].mxu0
        %v1869 = vadd.f32 %v1748, %v1868
        %v1870 = vpop.f32.mrb[0].mxu0
        %v1871 = vadd.f32 %v1751, %v1870
        %v1872 = vpop.f32.mrb[0].mxu0
        %v1873 = vadd.f32 %v1752, %v1872
        %1874 = vdwg.mxu0
        %v1875 = vtanh.pop %v1804
        %v1876 = vtanh.pop %v1806
        %v1877 = vtanh.pop %v1857
        %v1878 = vtanh.pop %v1859
        %v1879 = vtanh.pop %v1808
        %v1880 = vtanh.pop %v1810
        %v1881 = vtanh.pop %v1861
        %v1882 = vtanh.pop %v1863
        %v1883 = vtanh.pop %v1814
        %v1884 = vtanh.pop %v1816
        %v1885 = vtanh.pop %v1867
        %v1886 = vtanh.pop %v1869
        %v1887 = vtanh.pop %v1818
        %v1888 = vtanh.pop %v1820
        %v1889 = vtanh.pop %v1871
        %v1890 = vtanh.pop %v1873
        %v1891 = vld [vmem:[%s707] sm:$0xf]
        %v1892 = vld [vmem:[%s707 + $0x4] sm:$0xf]
        %v1893 = vld [vmem:[%s707 + $0x8] sm:$0xf]
        %v1894 = vld [vmem:[%s707 + $0xc] sm:$0xf]
        %v1895 = vpack.c.bf16 %v1879, %v1875
        %v1896 = vpack.c.bf16 %v1880, %v1876
        %v1897 = vpack.c.bf16 %v1881, %v1877
        %v1898 = vpack.c.bf16 %v1882, %v1878
        %v1899 = vpack.c.bf16 %v1887, %v1883
        %v1900 = vpack.c.bf16 %v1888, %v1884
        %v1901 = vpack.c.bf16 %v1889, %v1885
        %v1902 = vpack.c.bf16 %v1890, %v1886
        %v1903 = vld [vmem:[%s720] sm:$0xff]
        %v1904 = vld [vmem:[%s720 + $0x8] sm:$0xff]
        %v1905 = vld [vmem:[%s720 + $0x10] sm:$0xff]
        %v1906 = vld [vmem:[%s720 + $0x18] sm:$0xff]
        %v1907 = vld [vmem:[%s720 + $0x20] sm:$0xff]
        %v1908 = vld [vmem:[%s720 + $0x28] sm:$0xff]
        %v1909 = vld [vmem:[%s720 + $0x30] sm:$0xff]
        %v1910 = vld [vmem:[%s720 + $0x38] sm:$0xff]
        %v1911 = vld [vmem:[%s720 + $0x40] sm:$0xff]
        %v1912 = vld [vmem:[%s720 + $0x48] sm:$0xff]
        %v1913 = vld [vmem:[%s720 + $0x50] sm:$0xff]
        %v1914 = vld [vmem:[%s720 + $0x58] sm:$0xff]
        %v1915 = vld [vmem:[%s720 + $0x60] sm:$0xff]
        %v1916 = vld [vmem:[%s720 + $0x68] sm:$0xff]
        %v1917 = vld [vmem:[%s720 + $0x70] sm:$0xff]
        %v1918 = vld [vmem:[%s720 + $0x78] sm:$0xff]
        %v1923 = vunpack.c.l.b16 %v1891
        %v1924 = vunpack.c.l.b16 %v1892
        %v1925 = vunpack.c.l.b16 %v1893
        %v1926 = vunpack.c.l.b16 %v1894
        %v1927 = vpack.c.b16 %v1924, %v1923
        %v1928 = vpack.c.b16 %v1926, %v1925
        %v1930 = vsel %vm578, %v1927, 0
        %v1933 = vsel %vm578, %v1928, 0
        %1935 = vmatprep.subr.bf16.mxu0 %v1896
        %1936 = vmatpush1.bf16.msra.mxu0 %v1895
        %1937 = vmatprep.subr.bf16.mxu0 %v1900
        %1938 = vmatpush1.bf16.msra.mxu0 %v1899
        %1939 = vmatprep.subr.bf16.mxu0 0
        %1940 = vmatpush1.bf16.msra.mxu0 0
        %1941 = vmatprep.subr.bf16.mxu0 0
        %1942 = vmatpush1.bf16.msra.mxu0 0
        %1943 = vmatprep.subr.bf16.mxu0 0
        %1944 = vmatpush1.bf16.msra.mxu0 0
        %1945 = vmatprep.subr.bf16.mxu0 0
        %1946 = vmatpush1.bf16.msra.mxu0 0
        %1947 = vmatprep.subr.bf16.mxu0 0
        %1948 = vmatpush1.bf16.msra.mxu0 0
        %1949 = vmatprep.subr.bf16.mxu0 0
        %1950 = vmatpush1.bf16.msra.mxu0 0
        %1951 = vmatprep.subr.bf16.mxu0 0
        %1952 = vmatpush1.bf16.msra.mxu0 0
        %1953 = vmatprep.subr.bf16.mxu0 0
        %1954 = vmatpush1.bf16.msra.mxu0 0
        %1955 = vmatprep.subr.bf16.mxu0 0
        %1956 = vmatpush1.bf16.msra.mxu0 0
        %1957 = vmatprep.subr.bf16.mxu0 0
        %1958 = vmatpush1.bf16.msra.mxu0 0
        %1959 = vmatprep.subr.bf16.mxu0 0
        %1960 = vmatpush1.bf16.msra.mxu0 0
        %1961 = vmatprep.subr.bf16.mxu0 0
        %1962 = vmatpush1.bf16.msra.mxu0 0
        %1963 = vmatprep.subr.bf16.mxu0 0
        %1964 = vmatpush1.bf16.msra.mxu0 0
        %1965 = vmatprep.subr.bf16.mxu0 0
        %1966 = vmatpush1.bf16.msra.mxu0 0
        %1967 = vmatprep.mubr.bf16.mxu0 0
        %1968 = vmatmul.mubr.bf16.gmra.mrb[0].mxu0 %v1930
        %v1969 = vpop.f32.mrb[0].mxu0
        %v1970 = vadd.f32 %v1903, %v1969
        %v1971 = vpop.f32.mrb[0].mxu0
        %v1972 = vadd.f32 %v1904, %v1971
        %v1973 = vpop.f32.mrb[0].mxu0
        %v1974 = vadd.f32 %v1907, %v1973
        %v1975 = vpop.f32.mrb[0].mxu0
        %v1976 = vadd.f32 %v1908, %v1975
        %1977 = vmatprep.mubr.bf16.mxu0 0
        %1978 = vmatmul.mubr.bf16.gmra.mrb[0].mxu0 %v1933
        %v1979 = vpop.f32.mrb[0].mxu0
        %v1980 = vadd.f32 %v1911, %v1979
        %v1981 = vpop.f32.mrb[0].mxu0
        %v1982 = vadd.f32 %v1912, %v1981
        %v1983 = vpop.f32.mrb[0].mxu0
        %v1984 = vadd.f32 %v1915, %v1983
        %v1985 = vpop.f32.mrb[0].mxu0
        %v1986 = vadd.f32 %v1916, %v1985
        %1987 = vdwg.mxu0
        %1988 = vmatprep.subr.bf16.mxu0 %v1898
        %1989 = vmatpush1.bf16.msra.mxu0 %v1897
        %1990 = vmatprep.subr.bf16.mxu0 %v1902
        %1991 = vmatpush1.bf16.msra.mxu0 %v1901
        %1992 = vmatprep.subr.bf16.mxu0 0
        %1993 = vmatpush1.bf16.msra.mxu0 0
        %1994 = vmatprep.subr.bf16.mxu0 0
        %1995 = vmatpush1.bf16.msra.mxu0 0
        %1996 = vmatprep.subr.bf16.mxu0 0
        %1997 = vmatpush1.bf16.msra.mxu0 0
        %1998 = vmatprep.subr.bf16.mxu0 0
        %1999 = vmatpush1.bf16.msra.mxu0 0
        %2000 = vmatprep.subr.bf16.mxu0 0
        %2001 = vmatpush1.bf16.msra.mxu0 0
        %2002 = vmatprep.subr.bf16.mxu0 0
        %2003 = vmatpush1.bf16.msra.mxu0 0
        %2004 = vmatprep.subr.bf16.mxu0 0
        %2005 = vmatpush1.bf16.msra.mxu0 0
        %2006 = vmatprep.subr.bf16.mxu0 0
        %2007 = vmatpush1.bf16.msra.mxu0 0
        %2008 = vmatprep.subr.bf16.mxu0 0
        %2009 = vmatpush1.bf16.msra.mxu0 0
        %2010 = vmatprep.subr.bf16.mxu0 0
        %2011 = vmatpush1.bf16.msra.mxu0 0
        %2012 = vmatprep.subr.bf16.mxu0 0
        %2013 = vmatpush1.bf16.msra.mxu0 0
        %2014 = vmatprep.subr.bf16.mxu0 0
        %2015 = vmatpush1.bf16.msra.mxu0 0
        %2016 = vmatprep.subr.bf16.mxu0 0
        %2017 = vmatpush1.bf16.msra.mxu0 0
        %2018 = vmatprep.subr.bf16.mxu0 0
        %2019 = vmatpush1.bf16.msra.mxu0 0
        %2020 = vmatprep.mubr.bf16.mxu0 0
        %2021 = vmatmul.mubr.bf16.gmra.mrb[0].mxu0 %v1930
        %v2022 = vpop.f32.mrb[0].mxu0
        %v2023 = vadd.f32 %v1905, %v2022
        %v2024 = vpop.f32.mrb[0].mxu0
        %v2025 = vadd.f32 %v1906, %v2024
        %v2026 = vpop.f32.mrb[0].mxu0
        %v2027 = vadd.f32 %v1909, %v2026
        %v2028 = vpop.f32.mrb[0].mxu0
        %v2029 = vadd.f32 %v1910, %v2028
        %2030 = vmatprep.mubr.bf16.mxu0 0
        %2031 = vmatmul.mubr.bf16.gmra.mrb[0].mxu0 %v1933
        %v2032 = vpop.f32.mrb[0].mxu0
        %v2033 = vadd.f32 %v1913, %v2032
        %v2034 = vpop.f32.mrb[0].mxu0
        %v2035 = vadd.f32 %v1914, %v2034
        %v2036 = vpop.f32.mrb[0].mxu0
        %v2037 = vadd.f32 %v1917, %v2036
        %v2038 = vpop.f32.mrb[0].mxu0
        %v2039 = vadd.f32 %v1918, %v2038
        %2040 = vdwg.mxu0
        %v2041 = vtanh.pop %v1970
        %v2042 = vtanh.pop %v1972
        %v2043 = vtanh.pop %v2023
        %v2044 = vtanh.pop %v2025
        %v2045 = vtanh.pop %v1974
        %v2046 = vtanh.pop %v1976
        %v2047 = vtanh.pop %v2027
        %v2048 = vtanh.pop %v2029
        %v2049 = vtanh.pop %v1980
        %v2050 = vtanh.pop %v1982
        %v2051 = vtanh.pop %v2033
        %v2052 = vtanh.pop %v2035
        %v2053 = vtanh.pop %v1984
        %v2054 = vtanh.pop %v1986
        %v2055 = vtanh.pop %v2037
        %v2056 = vtanh.pop %v2039
        %v2057 = vld [vmem:[%s875] sm:$0xf]
        %v2058 = vld [vmem:[%s875 + $0x4] sm:$0xf]
        %v2059 = vld [vmem:[%s875 + $0x8] sm:$0xf]
        %v2060 = vld [vmem:[%s875 + $0xc] sm:$0xf]
        %v2061 = vpack.c.bf16 %v2045, %v2041
        %v2062 = vpack.c.bf16 %v2046, %v2042
        %v2063 = vpack.c.bf16 %v2047, %v2043
        %v2064 = vpack.c.bf16 %v2048, %v2044
        %v2065 = vpack.c.bf16 %v2053, %v2049
        %v2066 = vpack.c.bf16 %v2054, %v2050
        %v2067 = vpack.c.bf16 %v2055, %v2051
        %v2068 = vpack.c.bf16 %v2056, %v2052
        %v2069 = vld [vmem:[%s888] sm:$0xff]
        %v2070 = vld [vmem:[%s888 + $0x8] sm:$0xff]
        %v2071 = vld [vmem:[%s888 + $0x10] sm:$0xff]
        %v2072 = vld [vmem:[%s888 + $0x18] sm:$0xff]
        %v2073 = vld [vmem:[%s888 + $0x20] sm:$0xff]
        %v2074 = vld [vmem:[%s888 + $0x28] sm:$0xff]
        %v2075 = vld [vmem:[%s888 + $0x30] sm:$0xff]
        %v2076 = vld [vmem:[%s888 + $0x38] sm:$0xff]
        %v2077 = vld [vmem:[%s888 + $0x40] sm:$0xff]
        %v2078 = vld [vmem:[%s888 + $0x48] sm:$0xff]
        %v2079 = vld [vmem:[%s888 + $0x50] sm:$0xff]
        %v2080 = vld [vmem:[%s888 + $0x58] sm:$0xff]
        %v2081 = vld [vmem:[%s888 + $0x60] sm:$0xff]
        %v2082 = vld [vmem:[%s888 + $0x68] sm:$0xff]
        %v2083 = vld [vmem:[%s888 + $0x70] sm:$0xff]
        %v2084 = vld [vmem:[%s888 + $0x78] sm:$0xff]
        %v2089 = vunpack.c.l.b16 %v2057
        %v2090 = vunpack.c.l.b16 %v2058
        %v2091 = vunpack.c.l.b16 %v2059
        %v2092 = vunpack.c.l.b16 %v2060
        %v2093 = vpack.c.b16 %v2090, %v2089
        %v2094 = vpack.c.b16 %v2092, %v2091
        %v2096 = vsel %vm578, %v2093, 0
        %v2099 = vsel %vm578, %v2094, 0
        %2101 = vmatprep.subr.bf16.mxu0 %v2062
        %2102 = vmatpush1.bf16.msra.mxu0 %v2061
        %2103 = vmatprep.subr.bf16.mxu0 %v2066
        %2104 = vmatpush1.bf16.msra.mxu0 %v2065
        %2105 = vmatprep.subr.bf16.mxu0 0
        %2106 = vmatpush1.bf16.msra.mxu0 0
        %2107 = vmatprep.subr.bf16.mxu0 0
        %2108 = vmatpush1.bf16.msra.mxu0 0
        %2109 = vmatprep.subr.bf16.mxu0 0
        %2110 = vmatpush1.bf16.msra.mxu0 0
        %2111 = vmatprep.subr.bf16.mxu0 0
        %2112 = vmatpush1.bf16.msra.mxu0 0
        %2113 = vmatprep.subr.bf16.mxu0 0
        %2114 = vmatpush1.bf16.msra.mxu0 0
        %2115 = vmatprep.subr.bf16.mxu0 0
        %2116 = vmatpush1.bf16.msra.mxu0 0
        %2117 = vmatprep.subr.bf16.mxu0 0
        %2118 = vmatpush1.bf16.msra.mxu0 0
        %2119 = vmatprep.subr.bf16.mxu0 0
        %2120 = vmatpush1.bf16.msra.mxu0 0
        %2121 = vmatprep.subr.bf16.mxu0 0
        %2122 = vmatpush1.bf16.msra.mxu0 0
        %2123 = vmatprep.subr.bf16.mxu0 0
        %2124 = vmatpush1.bf16.msra.mxu0 0
        %2125 = vmatprep.subr.bf16.mxu0 0
        %2126 = vmatpush1.bf16.msra.mxu0 0
        %2127 = vmatprep.subr.bf16.mxu0 0
        %2128 = vmatpush1.bf16.msra.mxu0 0
        %2129 = vmatprep.subr.bf16.mxu0 0
        %2130 = vmatpush1.bf16.msra.mxu0 0
        %2131 = vmatprep.subr.bf16.mxu0 0
        %2132 = vmatpush1.bf16.msra.mxu0 0
        %2133 = vmatprep.mubr.bf16.mxu0 0
        %2134 = vmatmul.mubr.bf16.gmra.mrb[0].mxu0 %v2096
        %v2135 = vpop.f32.mrb[0].mxu0
        %v2136 = vadd.f32 %v2069, %v2135
        %v2137 = vpop.f32.mrb[0].mxu0
        %v2138 = vadd.f32 %v2070, %v2137
        %v2139 = vpop.f32.mrb[0].mxu0
        %v2140 = vadd.f32 %v2073, %v2139
        %v2141 = vpop.f32.mrb[0].mxu0
        %v2142 = vadd.f32 %v2074, %v2141
        %2143 = vmatprep.mubr.bf16.mxu0 0
        %2144 = vmatmul.mubr.bf16.gmra.mrb[0].mxu0 %v2099
        %v2145 = vpop.f32.mrb[0].mxu0
        %v2146 = vadd.f32 %v2077, %v2145
        %v2147 = vpop.f32.mrb[0].mxu0
        %v2148 = vadd.f32 %v2078, %v2147
        %v2149 = vpop.f32.mrb[0].mxu0
        %v2150 = vadd.f32 %v2081, %v2149
        %v2151 = vpop.f32.mrb[0].mxu0
        %v2152 = vadd.f32 %v2082, %v2151
        %2153 = vdwg.mxu0
        %2154 = vmatprep.subr.bf16.mxu0 %v2064
        %2155 = vmatpush1.bf16.msra.mxu0 %v2063
        %2156 = vmatprep.subr.bf16.mxu0 %v2068
        %2157 = vmatpush1.bf16.msra.mxu0 %v2067
        %2158 = vmatprep.subr.bf16.mxu0 0
        %2159 = vmatpush1.bf16.msra.mxu0 0
        %2160 = vmatprep.subr.bf16.mxu0 0
        %2161 = vmatpush1.bf16.msra.mxu0 0
        %2162 = vmatprep.subr.bf16.mxu0 0
        %2163 = vmatpush1.bf16.msra.mxu0 0
        %2164 = vmatprep.subr.bf16.mxu0 0
        %2165 = vmatpush1.bf16.msra.mxu0 0
        %2166 = vmatprep.subr.bf16.mxu0 0
        %2167 = vmatpush1.bf16.msra.mxu0 0
        %2168 = vmatprep.subr.bf16.mxu0 0
        %2169 = vmatpush1.bf16.msra.mxu0 0
        %2170 = vmatprep.subr.bf16.mxu0 0
        %2171 = vmatpush1.bf16.msra.mxu0 0
        %2172 = vmatprep.subr.bf16.mxu0 0
        %2173 = vmatpush1.bf16.msra.mxu0 0
        %2174 = vmatprep.subr.bf16.mxu0 0
        %2175 = vmatpush1.bf16.msra.mxu0 0
        %2176 = vmatprep.subr.bf16.mxu0 0
        %2177 = vmatpush1.bf16.msra.mxu0 0
        %2178 = vmatprep.subr.bf16.mxu0 0
        %2179 = vmatpush1.bf16.msra.mxu0 0
        %2180 = vmatprep.subr.bf16.mxu0 0
        %2181 = vmatpush1.bf16.msra.mxu0 0
        %2182 = vmatprep.subr.bf16.mxu0 0
        %2183 = vmatpush1.bf16.msra.mxu0 0
        %2184 = vmatprep.subr.bf16.mxu0 0
        %2185 = vmatpush1.bf16.msra.mxu0 0
        %2186 = vmatprep.mubr.bf16.mxu0 0
        %2187 = vmatmul.mubr.bf16.gmra.mrb[0].mxu0 %v2096
        %v2188 = vpop.f32.mrb[0].mxu0
        %v2189 = vadd.f32 %v2071, %v2188
        %v2190 = vpop.f32.mrb[0].mxu0
        %v2191 = vadd.f32 %v2072, %v2190
        %v2192 = vpop.f32.mrb[0].mxu0
        %v2193 = vadd.f32 %v2075, %v2192
        %v2194 = vpop.f32.mrb[0].mxu0
        %v2195 = vadd.f32 %v2076, %v2194
        %2196 = vmatprep.mubr.bf16.mxu0 0
        %2197 = vmatmul.mubr.bf16.gmra.mrb[0].mxu0 %v2099
        %v2198 = vpop.f32.mrb[0].mxu0
        %v2199 = vadd.f32 %v2079, %v2198
        %v2200 = vpop.f32.mrb[0].mxu0
        %v2201 = vadd.f32 %v2080, %v2200
        %v2202 = vpop.f32.mrb[0].mxu0
        %v2203 = vadd.f32 %v2083, %v2202
        %v2204 = vpop.f32.mrb[0].mxu0
        %v2205 = vadd.f32 %v2084, %v2204
        %2206 = vdwg.mxu0
        %v2207 = vtanh.pop %v2136
        %v2208 = vtanh.pop %v2138
        %v2209 = vtanh.pop %v2189
        %v2210 = vtanh.pop %v2191
        %v2211 = vtanh.pop %v2140
        %v2212 = vtanh.pop %v2142
        %v2213 = vtanh.pop %v2193
        %v2214 = vtanh.pop %v2195
        %v2215 = vtanh.pop %v2146
        %v2216 = vtanh.pop %v2148
        %v2217 = vtanh.pop %v2199
        %v2218 = vtanh.pop %v2201
        %v2219 = vtanh.pop %v2150
        %v2220 = vtanh.pop %v2152
        %v2221 = vtanh.pop %v2203
        %v2222 = vtanh.pop %v2205
        %v2223 = vld [vmem:[%s1043] sm:$0xf]
        %v2224 = vld [vmem:[%s1043 + $0x4] sm:$0xf]
        %v2225 = vld [vmem:[%s1043 + $0x8] sm:$0xf]
        %v2226 = vld [vmem:[%s1043 + $0xc] sm:$0xf]
        %v2227 = vpack.c.bf16 %v2211, %v2207
        %v2228 = vpack.c.bf16 %v2212, %v2208
        %v2229 = vpack.c.bf16 %v2213, %v2209
        %v2230 = vpack.c.bf16 %v2214, %v2210
        %v2231 = vpack.c.bf16 %v2219, %v2215
        %v2232 = vpack.c.bf16 %v2220, %v2216
        %v2233 = vpack.c.bf16 %v2221, %v2217
        %v2234 = vpack.c.bf16 %v2222, %v2218
        %v2235 = vld [vmem:[%s1056] sm:$0xff]
        %v2236 = vld [vmem:[%s1056 + $0x8] sm:$0xff]
        %v2237 = vld [vmem:[%s1056 + $0x10] sm:$0xff]
        %v2238 = vld [vmem:[%s1056 + $0x18] sm:$0xff]
        %v2239 = vld [vmem:[%s1056 + $0x20] sm:$0xff]
        %v2240 = vld [vmem:[%s1056 + $0x28] sm:$0xff]
        %v2241 = vld [vmem:[%s1056 + $0x30] sm:$0xff]
        %v2242 = vld [vmem:[%s1056 + $0x38] sm:$0xff]
        %v2243 = vld [vmem:[%s1056 + $0x40] sm:$0xff]
        %v2244 = vld [vmem:[%s1056 + $0x48] sm:$0xff]
        %v2245 = vld [vmem:[%s1056 + $0x50] sm:$0xff]
        %v2246 = vld [vmem:[%s1056 + $0x58] sm:$0xff]
        %v2247 = vld [vmem:[%s1056 + $0x60] sm:$0xff]
        %v2248 = vld [vmem:[%s1056 + $0x68] sm:$0xff]
        %v2249 = vld [vmem:[%s1056 + $0x70] sm:$0xff]
        %v2250 = vld [vmem:[%s1056 + $0x78] sm:$0xff]
        %v2255 = vunpack.c.l.b16 %v2223
        %v2256 = vunpack.c.l.b16 %v2224
        %v2257 = vunpack.c.l.b16 %v2225
        %v2258 = vunpack.c.l.b16 %v2226
        %v2259 = vpack.c.b16 %v2256, %v2255
        %v2260 = vpack.c.b16 %v2258, %v2257
        %v2262 = vsel %vm578, %v2259, 0
        %v2265 = vsel %vm578, %v2260, 0
        %2267 = vmatprep.subr.bf16.mxu0 %v2228
        %2268 = vmatpush1.bf16.msra.mxu0 %v2227
        %2269 = vmatprep.subr.bf16.mxu0 %v2232
        %2270 = vmatpush1.bf16.msra.mxu0 %v2231
        %2271 = vmatprep.subr.bf16.mxu0 0
        %2272 = vmatpush1.bf16.msra.mxu0 0
        %2273 = vmatprep.subr.bf16.mxu0 0
        %2274 = vmatpush1.bf16.msra.mxu0 0
        %2275 = vmatprep.subr.bf16.mxu0 0
        %2276 = vmatpush1.bf16.msra.mxu0 0
        %2277 = vmatprep.subr.bf16.mxu0 0
        %2278 = vmatpush1.bf16.msra.mxu0 0
        %2279 = vmatprep.subr.bf16.mxu0 0
        %2280 = vmatpush1.bf16.msra.mxu0 0
        %2281 = vmatprep.subr.bf16.mxu0 0
        %2282 = vmatpush1.bf16.msra.mxu0 0
        %2283 = vmatprep.subr.bf16.mxu0 0
        %2284 = vmatpush1.bf16.msra.mxu0 0
        %2285 = vmatprep.subr.bf16.mxu0 0
        %2286 = vmatpush1.bf16.msra.mxu0 0
        %2287 = vmatprep.subr.bf16.mxu0 0
        %2288 = vmatpush1.bf16.msra.mxu0 0
        %2289 = vmatprep.subr.bf16.mxu0 0
        %2290 = vmatpush1.bf16.msra.mxu0 0
        %2291 = vmatprep.subr.bf16.mxu0 0
        %2292 = vmatpush1.bf16.msra.mxu0 0
        %2293 = vmatprep.subr.bf16.mxu0 0
        %2294 = vmatpush1.bf16.msra.mxu0 0
        %2295 = vmatprep.subr.bf16.mxu0 0
        %2296 = vmatpush1.bf16.msra.mxu0 0
        %2297 = vmatprep.subr.bf16.mxu0 0
        %2298 = vmatpush1.bf16.msra.mxu0 0
        %2299 = vmatprep.mubr.bf16.mxu0 0
        %2300 = vmatmul.mubr.bf16.gmra.mrb[0].mxu0 %v2262
        %v2301 = vpop.f32.mrb[0].mxu0
        %v2302 = vadd.f32 %v2235, %v2301
        %v2303 = vpop.f32.mrb[0].mxu0
        %v2304 = vadd.f32 %v2236, %v2303
        %v2305 = vpop.f32.mrb[0].mxu0
        %v2306 = vadd.f32 %v2239, %v2305
        %v2307 = vpop.f32.mrb[0].mxu0
        %v2308 = vadd.f32 %v2240, %v2307
        %2309 = vmatprep.mubr.bf16.mxu0 0
        %2310 = vmatmul.mubr.bf16.gmra.mrb[0].mxu0 %v2265
        %v2311 = vpop.f32.mrb[0].mxu0
        %v2312 = vadd.f32 %v2243, %v2311
        %v2313 = vpop.f32.mrb[0].mxu0
        %v2314 = vadd.f32 %v2244, %v2313
        %v2315 = vpop.f32.mrb[0].mxu0
        %v2316 = vadd.f32 %v2247, %v2315
        %v2317 = vpop.f32.mrb[0].mxu0
        %v2318 = vadd.f32 %v2248, %v2317
        %2319 = vdwg.mxu0
        %2320 = vmatprep.subr.bf16.mxu0 %v2230
        %2321 = vmatpush1.bf16.msra.mxu0 %v2229
        %2322 = vmatprep.subr.bf16.mxu0 %v2234
        %2323 = vmatpush1.bf16.msra.mxu0 %v2233
        %2324 = vmatprep.subr.bf16.mxu0 0
        %2325 = vmatpush1.bf16.msra.mxu0 0
        %2326 = vmatprep.subr.bf16.mxu0 0
        %2327 = vmatpush1.bf16.msra.mxu0 0
        %2328 = vmatprep.subr.bf16.mxu0 0
        %2329 = vmatpush1.bf16.msra.mxu0 0
        %2330 = vmatprep.subr.bf16.mxu0 0
        %2331 = vmatpush1.bf16.msra.mxu0 0
        %2332 = vmatprep.subr.bf16.mxu0 0
        %2333 = vmatpush1.bf16.msra.mxu0 0
        %2334 = vmatprep.subr.bf16.mxu0 0
        %2335 = vmatpush1.bf16.msra.mxu0 0
        %2336 = vmatprep.subr.bf16.mxu0 0
        %2337 = vmatpush1.bf16.msra.mxu0 0
        %2338 = vmatprep.subr.bf16.mxu0 0
        %2339 = vmatpush1.bf16.msra.mxu0 0
        %2340 = vmatprep.subr.bf16.mxu0 0
        %2341 = vmatpush1.bf16.msra.mxu0 0
        %2342 = vmatprep.subr.bf16.mxu0 0
        %2343 = vmatpush1.bf16.msra.mxu0 0
        %2344 = vmatprep.subr.bf16.mxu0 0
        %2345 = vmatpush1.bf16.msra.mxu0 0
        %2346 = vmatprep.subr.bf16.mxu0 0
        %2347 = vmatpush1.bf16.msra.mxu0 0
        %2348 = vmatprep.subr.bf16.mxu0 0
        %2349 = vmatpush1.bf16.msra.mxu0 0
        %2350 = vmatprep.subr.bf16.mxu0 0
        %2351 = vmatpush1.bf16.msra.mxu0 0
        %2352 = vmatprep.mubr.bf16.mxu0 0
        %2353 = vmatmul.mubr.bf16.gmra.mrb[0].mxu0 %v2262
        %v2354 = vpop.f32.mrb[0].mxu0
        %v2355 = vadd.f32 %v2237, %v2354
        %v2356 = vpop.f32.mrb[0].mxu0
        %v2357 = vadd.f32 %v2238, %v2356
        %v2358 = vpop.f32.mrb[0].mxu0
        %v2359 = vadd.f32 %v2241, %v2358
        %v2360 = vpop.f32.mrb[0].mxu0
        %v2361 = vadd.f32 %v2242, %v2360
        %2362 = vmatprep.mubr.bf16.mxu0 0
        %2363 = vmatmul.mubr.bf16.gmra.mrb[0].mxu0 %v2265
        %v2364 = vpop.f32.mrb[0].mxu0
        %v2365 = vadd.f32 %v2245, %v2364
        %v2366 = vpop.f32.mrb[0].mxu0
        %v2367 = vadd.f32 %v2246, %v2366
        %v2368 = vpop.f32.mrb[0].mxu0
        %v2369 = vadd.f32 %v2249, %v2368
        %v2370 = vpop.f32.mrb[0].mxu0
        %v2371 = vadd.f32 %v2250, %v2370
        %2372 = vdwg.mxu0
        %v2373 = vtanh.pop %v2302
        %v2374 = vtanh.pop %v2304
        %v2375 = vtanh.pop %v2355
        %v2376 = vtanh.pop %v2357
        %v2377 = vtanh.pop %v2306
        %v2378 = vtanh.pop %v2308
        %v2379 = vtanh.pop %v2359
        %v2380 = vtanh.pop %v2361
        %v2381 = vtanh.pop %v2312
        %v2382 = vtanh.pop %v2314
        %v2383 = vtanh.pop %v2365
        %v2384 = vtanh.pop %v2367
        %v2385 = vtanh.pop %v2316
        %v2386 = vtanh.pop %v2318
        %v2387 = vtanh.pop %v2369
        %v2388 = vtanh.pop %v2371
        %v2389 = vld [vmem:[%s1211] sm:$0xf]
        %v2390 = vld [vmem:[%s1211 + $0x4] sm:$0xf]
        %v2391 = vld [vmem:[%s1211 + $0x8] sm:$0xf]
        %v2392 = vld [vmem:[%s1211 + $0xc] sm:$0xf]
        %v2393 = vpack.c.bf16 %v2377, %v2373
        %v2394 = vpack.c.bf16 %v2378, %v2374
        %v2395 = vpack.c.bf16 %v2379, %v2375
        %v2396 = vpack.c.bf16 %v2380, %v2376
        %v2397 = vpack.c.bf16 %v2385, %v2381
        %v2398 = vpack.c.bf16 %v2386, %v2382
        %v2399 = vpack.c.bf16 %v2387, %v2383
        %v2400 = vpack.c.bf16 %v2388, %v2384
        %v2401 = vld [vmem:[%s1224] sm:$0xff]
        %v2402 = vld [vmem:[%s1224 + $0x8] sm:$0xff]
        %v2403 = vld [vmem:[%s1224 + $0x10] sm:$0xff]
        %v2404 = vld [vmem:[%s1224 + $0x18] sm:$0xff]
        %v2405 = vld [vmem:[%s1224 + $0x20] sm:$0xff]
        %v2406 = vld [vmem:[%s1224 + $0x28] sm:$0xff]
        %v2407 = vld [vmem:[%s1224 + $0x30] sm:$0xff]
        %v2408 = vld [vmem:[%s1224 + $0x38] sm:$0xff]
        %v2409 = vld [vmem:[%s1224 + $0x40] sm:$0xff]
        %v2410 = vld [vmem:[%s1224 + $0x48] sm:$0xff]
        %v2411 = vld [vmem:[%s1224 + $0x50] sm:$0xff]
        %v2412 = vld [vmem:[%s1224 + $0x58] sm:$0xff]
        %v2413 = vld [vmem:[%s1224 + $0x60] sm:$0xff]
        %v2414 = vld [vmem:[%s1224 + $0x68] sm:$0xff]
        %v2415 = vld [vmem:[%s1224 + $0x70] sm:$0xff]
        %v2416 = vld [vmem:[%s1224 + $0x78] sm:$0xff]
        %v2421 = vunpack.c.l.b16 %v2389
        %v2422 = vunpack.c.l.b16 %v2390
        %v2423 = vunpack.c.l.b16 %v2391
        %v2424 = vunpack.c.l.b16 %v2392
        %v2425 = vpack.c.b16 %v2422, %v2421
        %v2426 = vpack.c.b16 %v2424, %v2423
        %v2428 = vsel %vm578, %v2425, 0
        %v2431 = vsel %vm578, %v2426, 0
        %2433 = vmatprep.subr.bf16.mxu0 %v2394
        %2434 = vmatpush1.bf16.msra.mxu0 %v2393
        %2435 = vmatprep.subr.bf16.mxu0 %v2398
        %2436 = vmatpush1.bf16.msra.mxu0 %v2397
        %2437 = vmatprep.subr.bf16.mxu0 0
        %2438 = vmatpush1.bf16.msra.mxu0 0
        %2439 = vmatprep.subr.bf16.mxu0 0
        %2440 = vmatpush1.bf16.msra.mxu0 0
        %2441 = vmatprep.subr.bf16.mxu0 0
        %2442 = vmatpush1.bf16.msra.mxu0 0
        %2443 = vmatprep.subr.bf16.mxu0 0
        %2444 = vmatpush1.bf16.msra.mxu0 0
        %2445 = vmatprep.subr.bf16.mxu0 0
        %2446 = vmatpush1.bf16.msra.mxu0 0
        %2447 = vmatprep.subr.bf16.mxu0 0
        %2448 = vmatpush1.bf16.msra.mxu0 0
        %2449 = vmatprep.subr.bf16.mxu0 0
        %2450 = vmatpush1.bf16.msra.mxu0 0
        %2451 = vmatprep.subr.bf16.mxu0 0
        %2452 = vmatpush1.bf16.msra.mxu0 0
        %2453 = vmatprep.subr.bf16.mxu0 0
        %2454 = vmatpush1.bf16.msra.mxu0 0
        %2455 = vmatprep.subr.bf16.mxu0 0
        %2456 = vmatpush1.bf16.msra.mxu0 0
        %2457 = vmatprep.subr.bf16.mxu0 0
        %2458 = vmatpush1.bf16.msra.mxu0 0
        %2459 = vmatprep.subr.bf16.mxu0 0
        %2460 = vmatpush1.bf16.msra.mxu0 0
        %2461 = vmatprep.subr.bf16.mxu0 0
        %2462 = vmatpush1.bf16.msra.mxu0 0
        %2463 = vmatprep.subr.bf16.mxu0 0
        %2464 = vmatpush1.bf16.msra.mxu0 0
        %2465 = vmatprep.mubr.bf16.mxu0 0
        %2466 = vmatmul.mubr.bf16.gmra.mrb[0].mxu0 %v2428
        %v2467 = vpop.f32.mrb[0].mxu0
        %v2468 = vadd.f32 %v2401, %v2467
        %v2469 = vpop.f32.mrb[0].mxu0
        %v2470 = vadd.f32 %v2402, %v2469
        %v2471 = vpop.f32.mrb[0].mxu0
        %v2472 = vadd.f32 %v2405, %v2471
        %v2473 = vpop.f32.mrb[0].mxu0
        %v2474 = vadd.f32 %v2406, %v2473
        %2475 = vmatprep.mubr.bf16.mxu0 0
        %2476 = vmatmul.mubr.bf16.gmra.mrb[0].mxu0 %v2431
        %v2477 = vpop.f32.mrb[0].mxu0
        %v2478 = vadd.f32 %v2409, %v2477
        %v2479 = vpop.f32.mrb[0].mxu0
        %v2480 = vadd.f32 %v2410, %v2479
        %v2481 = vpop.f32.mrb[0].mxu0
        %v2482 = vadd.f32 %v2413, %v2481
        %v2483 = vpop.f32.mrb[0].mxu0
        %v2484 = vadd.f32 %v2414, %v2483
        %2485 = vdwg.mxu0
        %2486 = vmatprep.subr.bf16.mxu0 %v2396
        %2487 = vmatpush1.bf16.msra.mxu0 %v2395
        %2488 = vmatprep.subr.bf16.mxu0 %v2400
        %2489 = vmatpush1.bf16.msra.mxu0 %v2399
        %2490 = vmatprep.subr.bf16.mxu0 0
        %2491 = vmatpush1.bf16.msra.mxu0 0
        %2492 = vmatprep.subr.bf16.mxu0 0
        %2493 = vmatpush1.bf16.msra.mxu0 0
        %2494 = vmatprep.subr.bf16.mxu0 0
        %2495 = vmatpush1.bf16.msra.mxu0 0
        %2496 = vmatprep.subr.bf16.mxu0 0
        %2497 = vmatpush1.bf16.msra.mxu0 0
        %2498 = vmatprep.subr.bf16.mxu0 0
        %2499 = vmatpush1.bf16.msra.mxu0 0
        %2500 = vmatprep.subr.bf16.mxu0 0
        %2501 = vmatpush1.bf16.msra.mxu0 0
        %2502 = vmatprep.subr.bf16.mxu0 0
        %2503 = vmatpush1.bf16.msra.mxu0 0
        %2504 = vmatprep.subr.bf16.mxu0 0
        %2505 = vmatpush1.bf16.msra.mxu0 0
        %2506 = vmatprep.subr.bf16.mxu0 0
        %2507 = vmatpush1.bf16.msra.mxu0 0
        %2508 = vmatprep.subr.bf16.mxu0 0
        %2509 = vmatpush1.bf16.msra.mxu0 0
        %2510 = vmatprep.subr.bf16.mxu0 0
        %2511 = vmatpush1.bf16.msra.mxu0 0
        %2512 = vmatprep.subr.bf16.mxu0 0
        %2513 = vmatpush1.bf16.msra.mxu0 0
        %2514 = vmatprep.subr.bf16.mxu0 0
        %2515 = vmatpush1.bf16.msra.mxu0 0
        %2516 = vmatprep.subr.bf16.mxu0 0
        %2517 = vmatpush1.bf16.msra.mxu0 0
        %2518 = vmatprep.mubr.bf16.mxu0 0
        %2519 = vmatmul.mubr.bf16.gmra.mrb[0].mxu0 %v2428
        %v2520 = vpop.f32.mrb[0].mxu0
        %v2521 = vadd.f32 %v2403, %v2520
        %v2522 = vpop.f32.mrb[0].mxu0
        %v2523 = vadd.f32 %v2404, %v2522
        %v2524 = vpop.f32.mrb[0].mxu0
        %v2525 = vadd.f32 %v2407, %v2524
        %v2526 = vpop.f32.mrb[0].mxu0
        %v2527 = vadd.f32 %v2408, %v2526
        %2528 = vmatprep.mubr.bf16.mxu0 0
        %2529 = vmatmul.mubr.bf16.gmra.mrb[0].mxu0 %v2431
        %v2530 = vpop.f32.mrb[0].mxu0
        %v2531 = vadd.f32 %v2411, %v2530
        %v2532 = vpop.f32.mrb[0].mxu0
        %v2533 = vadd.f32 %v2412, %v2532
        %v2534 = vpop.f32.mrb[0].mxu0
        %v2535 = vadd.f32 %v2415, %v2534
        %v2536 = vpop.f32.mrb[0].mxu0
        %v2537 = vadd.f32 %v2416, %v2536
        %2538 = vdwg.mxu0
        %v2539 = vtanh.pop %v2468
        %v2540 = vtanh.pop %v2470
        %v2541 = vtanh.pop %v2521
        %v2542 = vtanh.pop %v2523
        %v2543 = vtanh.pop %v2472
        %v2544 = vtanh.pop %v2474
        %v2545 = vtanh.pop %v2525
        %v2546 = vtanh.pop %v2527
        %v2547 = vtanh.pop %v2478
        %v2548 = vtanh.pop %v2480
        %v2549 = vtanh.pop %v2531
        %v2550 = vtanh.pop %v2533
        %v2551 = vtanh.pop %v2482
        %v2552 = vtanh.pop %v2484
        %v2553 = vtanh.pop %v2535
        %v2554 = vtanh.pop %v2537
        %v2555 = vld [vmem:[%s5] sm:$0x1]
        %v2556 = vpack.c.bf16 %v2543, %v2539
        %v2557 = vpack.c.bf16 %v2544, %v2540
        %v2558 = vpack.c.bf16 %v2545, %v2541
        %v2559 = vpack.c.bf16 %v2546, %v2542
        %v2560 = vpack.c.bf16 %v2551, %v2547
        %v2561 = vpack.c.bf16 %v2552, %v2548
        %v2562 = vpack.c.bf16 %v2553, %v2549
        %v2563 = vpack.c.bf16 %v2554, %v2550
        %v2564 = vld [vmem:[%s6] sm:$0xf]
        %v2566 = vlaneseq
        %v2567 = vshrl.u32 %v2566, 7
        %v2568 = vsub.s32 0, %v2567
        %v2569 = vrot.slane %v2564, %v2568
        %v2570 = vlaneseq
        %v2571 = vshrl.u32 %v2570, 7
        %v2572 = vsub.s32 1, %v2571
        %v2573 = vrot.slane %v2564, %v2572
        %v2574 = vlaneseq
        %v2575 = vshrl.u32 %v2574, 7
        %v2576 = vsub.s32 2, %v2575
        %v2577 = vrot.slane %v2564, %v2576
        %v2578 = vlaneseq
        %v2579 = vshrl.u32 %v2578, 7
        %v2580 = vsub.s32 3, %v2579
        %v2581 = vrot.slane %v2564, %v2580
        %v2587 = vsel %vm578, %v2555, 0
        %2589 = vmatprep.subr.bf16.mxu0 %v2557
        %2590 = vmatpush1.bf16.msra.mxu0 %v2556
        %2591 = vmatprep.subr.bf16.mxu0 %v2561
        %2592 = vmatpush1.bf16.msra.mxu0 %v2560
        %2593 = vmatprep.subr.bf16.mxu0 0
        %2594 = vmatpush1.bf16.msra.mxu0 0
        %2595 = vmatprep.subr.bf16.mxu0 0
        %2596 = vmatpush1.bf16.msra.mxu0 0
        %2597 = vmatprep.subr.bf16.mxu0 0
        %2598 = vmatpush1.bf16.msra.mxu0 0
        %2599 = vmatprep.subr.bf16.mxu0 0
        %2600 = vmatpush1.bf16.msra.mxu0 0
        %2601 = vmatprep.subr.bf16.mxu0 0
        %2602 = vmatpush1.bf16.msra.mxu0 0
        %2603 = vmatprep.subr.bf16.mxu0 0
        %2604 = vmatpush1.bf16.msra.mxu0 0
        %2605 = vmatprep.subr.bf16.mxu0 0
        %2606 = vmatpush1.bf16.msra.mxu0 0
        %2607 = vmatprep.subr.bf16.mxu0 0
        %2608 = vmatpush1.bf16.msra.mxu0 0
        %2609 = vmatprep.subr.bf16.mxu0 0
        %2610 = vmatpush1.bf16.msra.mxu0 0
        %2611 = vmatprep.subr.bf16.mxu0 0
        %2612 = vmatpush1.bf16.msra.mxu0 0
        %2613 = vmatprep.subr.bf16.mxu0 0
        %2614 = vmatpush1.bf16.msra.mxu0 0
        %2615 = vmatprep.subr.bf16.mxu0 0
        %2616 = vmatpush1.bf16.msra.mxu0 0
        %2617 = vmatprep.subr.bf16.mxu0 0
        %2618 = vmatpush1.bf16.msra.mxu0 0
        %2619 = vmatprep.subr.bf16.mxu0 0
        %2620 = vmatpush1.bf16.msra.mxu0 0
        %2621 = vmatprep.mubr.bf16.mxu0 0
        %2622 = vmatmul.mubr.bf16.gmra.mrb[0].mxu0 %v2587
        %v2623 = vpop.f32.mrb[0].mxu0
        %v2624 = vadd.f32 %v2569, %v2623
        %v2625 = vpop.f32.mrb[0].mxu0
        %v2626 = vadd.f32 %v2573, %v2625
        %v2627 = vpop.f32.mrb[0].mxu0
        %v2628 = vpop.f32.mrb[0].mxu0
        %2629 = vdwg.mxu0
        %2630 = vmatprep.subr.bf16.mxu0 %v2559
        %2631 = vmatpush1.bf16.msra.mxu0 %v2558
        %2632 = vmatprep.subr.bf16.mxu0 %v2563
        %2633 = vmatpush1.bf16.msra.mxu0 %v2562
        %2634 = vmatprep.subr.bf16.mxu0 0
        %2635 = vmatpush1.bf16.msra.mxu0 0
        %2636 = vmatprep.subr.bf16.mxu0 0
        %2637 = vmatpush1.bf16.msra.mxu0 0
        %2638 = vmatprep.subr.bf16.mxu0 0
        %2639 = vmatpush1.bf16.msra.mxu0 0
        %2640 = vmatprep.subr.bf16.mxu0 0
        %2641 = vmatpush1.bf16.msra.mxu0 0
        %2642 = vmatprep.subr.bf16.mxu0 0
        %2643 = vmatpush1.bf16.msra.mxu0 0
        %2644 = vmatprep.subr.bf16.mxu0 0
        %2645 = vmatpush1.bf16.msra.mxu0 0
        %2646 = vmatprep.subr.bf16.mxu0 0
        %2647 = vmatpush1.bf16.msra.mxu0 0
        %2648 = vmatprep.subr.bf16.mxu0 0
        %2649 = vmatpush1.bf16.msra.mxu0 0
        %2650 = vmatprep.subr.bf16.mxu0 0
        %2651 = vmatpush1.bf16.msra.mxu0 0
        %2652 = vmatprep.subr.bf16.mxu0 0
        %2653 = vmatpush1.bf16.msra.mxu0 0
        %2654 = vmatprep.subr.bf16.mxu0 0
        %2655 = vmatpush1.bf16.msra.mxu0 0
        %2656 = vmatprep.subr.bf16.mxu0 0
        %2657 = vmatpush1.bf16.msra.mxu0 0
        %2658 = vmatprep.subr.bf16.mxu0 0
        %2659 = vmatpush1.bf16.msra.mxu0 0
        %2660 = vmatprep.subr.bf16.mxu0 0
        %2661 = vmatpush1.bf16.msra.mxu0 0
        %2662 = vmatprep.mubr.bf16.mxu0 0
        %2663 = vmatmul.mubr.bf16.gmra.mrb[0].mxu0 %v2587
        %v2664 = vpop.f32.mrb[0].mxu0
        %v2665 = vadd.f32 %v2577, %v2664
        %v2666 = vpop.f32.mrb[0].mxu0
        %v2667 = vadd.f32 %v2581, %v2666
        %v2668 = vpop.f32.mrb[0].mxu0
        %v2669 = vpop.f32.mrb[0].mxu0
        %2670 = vdwg.mxu0
        %v2675 = vcombine.low %v2624, %v2626
        %v2676 = vcombine.low %v2665, %v2667
        %v2678 = vunpack.c.l.s4 1966171168
        %v2679 = vunpack.c.0.s8 %v2678
        %v2680 = vlaneseq
        %v2681 = vshrl.u32 %v2680, 7
        %v2682 = vsub.s32 %v2679, %v2681
        %v2683 = vrot.slane %v2675, %v2682
        %v2685 = vunpack.c.l.s4 1966171168
        %v2686 = vunpack.c.0.s8 %v2685
        %v2687 = vlaneseq
        %v2688 = vshrl.u32 %v2687, 7
        %v2689 = vsub.s32 %v2686, %v2688
        %v2690 = vrot.slane %v2676, %v2689
        %v2691 = vcombine.low %v2683, %v2690
        %v2693 = vunpack.c.l.s4 1966171168
        %v2694 = vunpack.c.0.s8 %v2693
        %v2695 = vlaneseq
        %v2696 = vshrl.u32 %v2695, 7
        %v2697 = vsub.s32 %v2694, %v2696
        %v2698 = vrot.slane %v2691, %v2697
        %2700 = vst.msk [vmem:[%s338 + $0x4] sm:$0xf] %vm1527, %v2698
        %s2701 = sand.u32 %s186, 1
        %s2702 = scalar_lea.sflag [#allocation4], %s2701
        %s2703 = sand.u32 %s186, 1
        %s2704 = smul.addr %s2703, 8
        %s2705 = scalar_lea.vmem [#allocation10], %s2704
        // Predicated region
        $region65: #{tpu_custom_call.1} parent=47 // pred_check
          %p2706 = pneg %p196
        $region66: #{tpu_custom_call.1} parent=47 // pred_check_branch
          %2708 = sbr.rel (%p2706) target = $region68
        $region67: #{tpu_custom_call.1} parent=47 // pred_region
          %s2709 = smul.u32 8, %s26
          %s2711 = ssub.s32 128, 128
          %2712 = vsyncadd %s2702, %s2711
          %s2713 = smul.addr %s2709, 16
          %s2714 = scalar_lea.hbm %s7, %s2713
          %s2716 = sshll.u32 %s2705, 4
          %s2717 = int_to_ptr.vmem [resolvable:$true] %s2716
          %2719 = dma.vmem_to_hbm [thread:$0]  %s2717, 128, %s2714, %s2702
        $region68: #{tpu_custom_call.1} parent=47 // pred_fallthru
          _
      $region48: #{tpu_custom_call.1} parent=5 // pred_fallthru
        _
      %p2720 = scmp.le.s32.totalorder 2, %s21
      // Predicated region
      $region69: #{tpu_custom_call.1} parent=5 // pred_check
        %p2721 = pneg %p2720
      $region70: #{tpu_custom_call.1} parent=5 // pred_check_branch
        %2723 = sbr.rel (%p2721) target = $region72
      $region71: #{tpu_custom_call.1} parent=5 // pred_region
        %s2724 = ssub.s32 %s21, 2
        // Predicated region
        $region73: #{tpu_custom_call.1} parent=71 // pred_check
          %p2725 = pneg %p202
        $region74: #{tpu_custom_call.1} parent=71 // pred_check_branch
          %2727 = sbr.rel (%p2725) target = $region76
        $region75: #{tpu_custom_call.1} parent=71 // pred_region
          %s2728 = sand.u32 %s187, 1
          %s2729 = scalar_lea.sflag [#allocation4], %s2728
          %s2730 = sand.u32 %s187, 1
          %s2731 = smul.addr %s2730, 8
          %s2732 = scalar_lea.vmem [#allocation10], %s2731
          %2733 = dma.done %s2729, 128
        $region76: #{tpu_custom_call.1} parent=71 // pred_fallthru
          _
      $region72: #{tpu_custom_call.1} parent=5 // pred_fallthru
        _
    $region6: #{tpu_custom_call.1} parent=1 // loop_footer
      %s25 = sadd.s32 1, %s21
    $region7: #{tpu_custom_call.1} parent=1 // loop_footer_branch
      %20 = sbr.rel target = $region3
    $region8: #{tpu_custom_call.1} parent=1 // loop_exit
      _
    %2734 = vsyncpa [#allocation3], 1
    %s2735 = scalar_lea.sflag [#allocation3], 1
    %2736 = vsyncpa %s2735, 1
    %2737 = vsyncpa [#allocation6], 1
    %2738 = vsyncpa [#allocation9], 1
    %2739 = vsyncpa [#allocation4], 1
    %s2740 = scalar_lea.sflag [#allocation4], 1
    %2741 = vsyncpa %s2740, 1

</llo_original>
